<compile_context>
chip_gen: v7x
topology: tpu7x:2x2x1
jax: 0.10.0
libtpu: 0.0.40
codegen_flags: <defaults>
</compile_context>

<pallas_src>
import functools

import jax
import jax.numpy as jnp
import numpy as np
from jax.experimental import pallas as pl
from jax.experimental.pallas import tpu as pltpu

LHID = 128


# --------------------------------------------------------------------------------------
# Kernel 1: attention for ALL graphs in one grid step
#   tanh(maps @ [W1_0|W1_1|...] + [b1_0|b1_1|...]) ; fc2 as mul+reduce ; softmax over nn_num
# --------------------------------------------------------------------------------------
def _attn_kernel(maps_ref, w1_ref, b1_ref, w2_ref, b2_ref, attn_ref, *,
                 m, nn_num, graph_num):
    # maps_ref: (m*nn_num, loc)          flat, node-major / neighbor-minor
    # w1_ref  : (loc, graph_num*LHID)    fc1 weights stacked along MXU N
    # b1_ref  : (1, graph_num*LHID)
    # w2_ref  : (graph_num, LHID)
    # b2_ref  : (graph_num, 1)
    # attn_ref: (graph_num, m*nn_num)    lane-dense output
    h = jnp.tanh(
        jnp.dot(maps_ref[...], w1_ref[...], preferred_element_type=jnp.float32)
        + b1_ref[...])                                        # (m*nn, G*LHID): ONE MXU pass
    w2 = w2_ref[...]
    b2 = b2_ref[...]
    rows = []
    for g in range(graph_num):                                # static unroll; graph_num small
        hg = h[:, g * LHID:(g + 1) * LHID]                    # 128-lane-aligned slice
        hg = hg.reshape(m, nn_num, LHID)                      # split rows only
        # fc2 as VPU multiply + lane reduce (skips an N=1 MXU pass).
        s = jnp.sum(hg * w2[g:g + 1, :].reshape(1, 1, LHID), axis=-1)   # (m, nn_num)
        s = s + b2[g:g + 1, :]
        s = s - jnp.max(s, axis=-1, keepdims=True)            # softmax over nn_num
        e = jnp.exp(s)
        a = e / jnp.sum(e, axis=-1, keepdims=True)
        rows.append(a.reshape(1, m * nn_num))
    attn_ref[...] = jnp.concatenate(rows, axis=0)             # single lane-dense store


def attention(maps_flat, w1, b1, w2, b2, *, m, nn_num, graph_num, loc):
    # maps_flat: (m*nn_num, loc)
    gl = graph_num * LHID
    mn = m * nn_num
    w1s = jnp.transpose(w1, (1, 0, 2)).reshape(loc, gl)       # (loc, G*LHID)
    b1s = b1.reshape(1, gl)                                   # (1, G*LHID)
    w2s = w2.reshape(graph_num, LHID)                         # (G, LHID)
    b2s = b2.reshape(graph_num, 1)                            # (G, 1)

    kernel = functools.partial(_attn_kernel, m=m, nn_num=nn_num, graph_num=graph_num)
    cost = pl.CostEstimate(
        flops=int(2 * mn * loc * gl + 3 * mn * gl + 6 * mn * graph_num),
        transcendentals=int(mn * gl + mn * graph_num),
        bytes_accessed=int(4 * (mn * loc + loc * gl + 2 * gl + graph_num + graph_num * mn)),
    )
    return pl.pallas_call(
        kernel,
        out_shape=jax.ShapeDtypeStruct((graph_num, mn), jnp.float32),
        grid_spec=pltpu.PrefetchScalarGridSpec(
            num_scalar_prefetch=0,
            grid=(1,),
            in_specs=[
                pl.BlockSpec((mn, loc), lambda i: (0, 0)),
                pl.BlockSpec((loc, gl), lambda i: (0, 0)),
                pl.BlockSpec((1, gl), lambda i: (0, 0)),
                pl.BlockSpec((graph_num, LHID), lambda i: (0, 0)),
                pl.BlockSpec((graph_num, 1), lambda i: (0, 0)),
            ],
            out_specs=pl.BlockSpec((graph_num, mn), lambda i: (0, 0)),
        ),
        compiler_params=pltpu.CompilerParams(dimension_semantics=("arbitrary",)),
        cost_estimate=cost,
    )(maps_flat, w1s, b1s, w2s, b2s)


# --------------------------------------------------------------------------------------
# Kernel 2: XeLayer  y[b] = x[b] @ W0 + sum_g (L_g @ x[b]) @ W_g + bias
#   batch-blocked (bb samples / grid step), graph weights stacked along K.
# --------------------------------------------------------------------------------------
def _xe_kernel(x_ref, L_ref, wg_ref, w0_ref, b_ref, o_ref, *, graph_num, bb, m):
    # x_ref : (bb, m, in)
    # L_ref : (graph_num, m, m)
    # wg_ref: (graph_num*in, out)    row-stacked graph weights
    # w0_ref: (in, out)
    # b_ref : (1, out)
    # o_ref : (bb, m, out)
    xb = x_ref[...]
    in_f = xb.shape[-1]
    out_f = o_ref.shape[-1]
    x_flat = xb.reshape(bb * m, in_f)                                       # M = bb*m rows
    acc = jnp.dot(x_flat, w0_ref[...], preferred_element_type=jnp.float32)  # (bb*m, out)

    lx_parts = []
    for g in range(graph_num):                                              # static unroll
        lg = jnp.broadcast_to(L_ref[g], (bb, m, m))
        lx = jnp.einsum("bnk,bkf->bnf", lg, xb,
                        preferred_element_type=jnp.float32)                 # (bb, m, in)
        lx_parts.append(lx)
    # concat graph results along the feature axis -> ONE matmul with K = graph_num*in
    lx_cat = jnp.concatenate(lx_parts, axis=-1).reshape(bb * m, graph_num * in_f)
    acc = acc + jnp.dot(lx_cat, wg_ref[...], preferred_element_type=jnp.float32)

    o_ref[...] = (acc + b_ref[...]).astype(o_ref.dtype).reshape(bb, m, out_f)


def _pick_batch_block(batch, m, target_rows=128):
    cap = max(1, target_rows // max(m, 1))
    for d in range(min(batch, cap), 0, -1):
        if batch % d == 0:
            return d
    return 1


def xe_layer(x, L, wg, w0, bias, *, m, in_f, out_f, graph_num):
    batch = x.shape[0]
    bb = _pick_batch_block(batch, m)                         # bb*m ~ 128 matmul rows
    wg_stacked = wg.reshape(graph_num * in_f, out_f)         # (G*in, out)
    kernel = functools.partial(_xe_kernel, graph_num=graph_num, bb=bb, m=m)
    cost = pl.CostEstimate(
        flops=int(2 * batch * m * (in_f * out_f * (graph_num + 1) + graph_num * m * in_f)),
        transcendentals=0,
        bytes_accessed=int(4 * (batch * m * in_f + graph_num * m * m
                                + (graph_num + 1) * in_f * out_f + out_f
                                + batch * m * out_f)),
    )
    return pl.pallas_call(
        kernel,
        out_shape=jax.ShapeDtypeStruct((batch, m, out_f), jnp.float32),
        grid_spec=pltpu.PrefetchScalarGridSpec(
            num_scalar_prefetch=0,
            grid=(batch // bb,),
            in_specs=[
                pl.BlockSpec((bb, m, in_f), lambda b: (b, 0, 0)),
                pl.BlockSpec((graph_num, m, m), lambda b: (0, 0, 0)),
                pl.BlockSpec((graph_num * in_f, out_f), lambda b: (0, 0)),
                pl.BlockSpec((in_f, out_f), lambda b: (0, 0)),
                pl.BlockSpec((1, out_f), lambda b: (0, 0)),
            ],
            out_specs=pl.BlockSpec((bb, m, out_f), lambda b: (b, 0, 0)),
        ),
        compiler_params=pltpu.CompilerParams(dimension_semantics=("parallel",)),
        cost_estimate=cost,
    )(x, L, wg_stacked, w0, bias)


# --------------------------------------------------------------------------------------
# GraphConv forward
# --------------------------------------------------------------------------------------
def graph_conv_forward(x, maps, L_idx, params, *, node_num, loc_feature, graph_num):
    m = node_num
    maps2 = maps.reshape(-1, loc_feature)          # maps.view(-1, loc_feature); no transpose needed
    nn_num = L_idx.shape[0] // m

    attn = attention(maps2, params["w1"], params["b1"], params["w2"], params["b2"],
                     m=m, nn_num=nn_num, graph_num=graph_num, loc=loc_feature)
    # attn is already lane-dense (graph_num, m*nn_num).

    # Scatter  L[:, L_idx] = attn  (index plumbing; not the hot path).
    L = jnp.zeros((graph_num, m * m), jnp.float32).at[:, L_idx].set(attn)
    L = L.reshape(graph_num, m, m)                 # broadcast over batch inside the kernel

    out = xe_layer(x, L, params["wg"], params["w0"], params["bias"],
                   m=m, in_f=x.shape[-1], out_f=params["wg"].shape[-1],
                   graph_num=graph_num)
    return out


# --------------------------------------------------------------------------------------
# Pure-JAX reference for correctness checking
# --------------------------------------------------------------------------------------
def graph_conv_ref(x, maps, L_idx, params, *, node_num, loc_feature, graph_num):
    m = node_num
    maps2 = maps.reshape(-1, loc_feature)
    nn_num = L_idx.shape[0] // m
    y = jnp.einsum("bnf,fo->bno", x, params["w0"]) + params["bias"]
    for i in range(graph_num):
        ctx = jnp.tanh(maps2 @ params["w1"][i] + params["b1"][i, 0])
        ctx = ctx @ params["w2"][i] + params["b2"][i, 0]
        ctx = ctx.reshape(m, nn_num)
        attn = jax.nn.softmax(ctx, axis=1).reshape(-1)
        Li = jnp.zeros(m * m, jnp.float32).at[L_idx].set(attn).reshape(m, m)
        lx = jnp.einsum("nk,bkf->bnf", Li, x)
        y = y + jnp.einsum("bnf,fo->bno", lx, params["wg"][i])
    return y


if __name__ == "__main__":
    # Small, module-consistent shapes.
    node_num, in_feature, out_feature, loc_feature, graph_num = 16, 32, 32, 8, 2
    nn_num, batch = 8, 2
    m = node_num

    key = jax.random.PRNGKey(0)
    k = jax.random.split(key, 10)
    params = {
        "w1": jax.random.normal(k[0], (graph_num, loc_feature, LHID), jnp.float32) * 0.1,
        "b1": jax.random.normal(k[1], (graph_num, 1, LHID), jnp.float32) * 0.1,
        "w2": jax.random.normal(k[2], (graph_num, LHID, 1), jnp.float32) * 0.1,
        "b2": jax.random.normal(k[3], (graph_num, 1, 1), jnp.float32) * 0.1,
        "wg": jax.random.normal(k[4], (graph_num, in_feature, out_feature), jnp.float32) * 0.1,
        "w0": jax.random.normal(k[5], (in_feature, out_feature), jnp.float32) * 0.1,
        "bias": jax.random.normal(k[6], (1, out_feature), jnp.float32) * 0.1,
    }

    x = jax.random.normal(k[7], (batch, m, in_feature), jnp.float32)
    maps = jax.random.normal(k[8], (m * nn_num, loc_feature), jnp.float32)

    # Deterministic sparse structure: node i attends to columns (3*i + k) % m.
    cols = (jnp.arange(m)[:, None] * 3 + jnp.arange(nn_num)[None, :]) % m
    L_idx = (jnp.arange(m)[:, None] * m + cols).reshape(-1).astype(jnp.int32)

    fwd = jax.jit(functools.partial(graph_conv_forward, node_num=node_num,
                                    loc_feature=loc_feature, graph_num=graph_num))
    out = fwd(x, maps, L_idx, params)
    out = jax.block_until_ready(out)

    ref = graph_conv_ref(x, maps, L_idx, params, node_num=node_num,
                         loc_feature=loc_feature, graph_num=graph_num)
    np.testing.assert_allclose(np.asarray(out), np.asarray(ref), rtol=1e-5, atol=1e-5)

    print("KERNEL_OK")
</pallas_src>

<mosaic_0001>
module attributes {stable_mosaic.version = 11 : i64} {
  func.func @_attn_kernel(%arg0: i32, %arg1: memref<128x8xf32, #tpu.memory_space<vmem>>, %arg2: memref<8x256xf32, #tpu.memory_space<vmem>>, %arg3: memref<1x256xf32, #tpu.memory_space<vmem>>, %arg4: memref<2x128xf32, #tpu.memory_space<vmem>>, %arg5: memref<2x1xf32, #tpu.memory_space<vmem>>, %arg6: memref<2x128xf32, #tpu.memory_space<vmem>>) attributes {dimension_semantics = [#tpu.dimension_semantics<arbitrary>], iteration_bounds = array<i64: 1>, scalar_prefetch = 0 : i64, scratch_operands = 0 : i64, tpu.core_type = #tpu.core_type<tc>, window_params = [{pipeline_mode = #tpu.pipeline_mode<synchronous>, transform_indices = @transform_0, window_bounds = array<i64: 128, 8>}, {pipeline_mode = #tpu.pipeline_mode<synchronous>, transform_indices = @transform_1, window_bounds = array<i64: 8, 256>}, {pipeline_mode = #tpu.pipeline_mode<synchronous>, transform_indices = @transform_2, window_bounds = array<i64: 1, 256>}, {pipeline_mode = #tpu.pipeline_mode<synchronous>, transform_indices = @transform_3, window_bounds = array<i64: 2, 128>}, {pipeline_mode = #tpu.pipeline_mode<synchronous>, transform_indices = @transform_4, window_bounds = array<i64: 2, 1>}, {pipeline_mode = #tpu.pipeline_mode<synchronous>, transform_indices = @transform_5, window_bounds = array<i64: 2, 128>}]} {
    %c0 = arith.constant 0 : index
    %c0_0 = arith.constant 0 : index
    %0 = vector.load %arg1[%c0, %c0_0] : memref<128x8xf32, #tpu.memory_space<vmem>>, vector<128x8xf32>
    %c0_1 = arith.constant 0 : index
    %c0_2 = arith.constant 0 : index
    %1 = vector.load %arg2[%c0_1, %c0_2] : memref<8x256xf32, #tpu.memory_space<vmem>>, vector<8x256xf32>
    %cst = arith.constant dense<0.000000e+00> : vector<128x256xf32>
    %2 = tpu.matmul %0, %1, %cst {dimension_numbers = #tpu.dot_dimension_numbers<[1], [0], [0], [1], [0, 0, 1, 1], [], []>} : vector<128x8xf32>, vector<8x256xf32>, vector<128x256xf32> -> vector<128x256xf32>
    %c0_3 = arith.constant 0 : index
    %c0_4 = arith.constant 0 : index
    %3 = vector.load %arg3[%c0_3, %c0_4] : memref<1x256xf32, #tpu.memory_space<vmem>>, vector<1x256xf32>
    %4 = vector.broadcast %3 : vector<1x256xf32> to vector<128x256xf32>
    %5 = arith.addf %2, %4 : vector<128x256xf32>
    %6 = math.tanh %5 : vector<128x256xf32>
    %c0_5 = arith.constant 0 : index
    %c0_6 = arith.constant 0 : index
    %7 = vector.load %arg4[%c0_5, %c0_6] : memref<2x128xf32, #tpu.memory_space<vmem>>, vector<2x128xf32>
    %c0_7 = arith.constant 0 : index
    %c0_8 = arith.constant 0 : index
    %8 = vector.load %arg5[%c0_7, %c0_8] : memref<2x1xf32, #tpu.memory_space<vmem>>, vector<2x1xf32>
    %9 = vector.extract_strided_slice %6 {offsets = [0, 0], sizes = [128, 128], strides = [1, 1]} : vector<128x256xf32> to vector<128x128xf32>
    %10 = vector.shape_cast %9 : vector<128x128xf32> to vector<16x8x128xf32>
    %11 = vector.extract_strided_slice %7 {offsets = [0, 0], sizes = [1, 128], strides = [1, 1]} : vector<2x128xf32> to vector<1x128xf32>
    %12 = vector.shape_cast %11 : vector<1x128xf32> to vector<1x1x128xf32>
    %13 = vector.broadcast %12 : vector<1x1x128xf32> to vector<16x8x128xf32>
    %14 = arith.mulf %10, %13 : vector<16x8x128xf32>
    %cst_9 = arith.constant dense<0.000000e+00> : vector<16x8xf32>
    %15 = vector.multi_reduction <add>, %14, %cst_9 [2] : vector<16x8x128xf32> to vector<16x8xf32>
    %16 = vector.extract_strided_slice %8 {offsets = [0, 0], sizes = [1, 1], strides = [1, 1]} : vector<2x1xf32> to vector<1x1xf32>
    %17 = vector.broadcast %16 : vector<1x1xf32> to vector<16x8xf32>
    %18 = arith.addf %15, %17 : vector<16x8xf32>
    %cst_10 = arith.constant dense<0xFF800000> : vector<16xf32>
    %19 = vector.multi_reduction <maximumf>, %18, %cst_10 [1] : vector<16x8xf32> to vector<16xf32>
    %20 = vector.shape_cast %19 : vector<16xf32> to vector<16x1xf32>
    %21 = vector.broadcast %20 : vector<16x1xf32> to vector<16x8xf32>
    %22 = arith.subf %18, %21 : vector<16x8xf32>
    %23 = math.exp %22 : vector<16x8xf32>
    %cst_11 = arith.constant dense<0.000000e+00> : vector<16xf32>
    %24 = vector.multi_reduction <add>, %23, %cst_11 [1] : vector<16x8xf32> to vector<16xf32>
    %25 = vector.shape_cast %24 : vector<16xf32> to vector<16x1xf32>
    %26 = vector.broadcast %25 : vector<16x1xf32> to vector<16x8xf32>
    %27 = arith.divf %23, %26 : vector<16x8xf32>
    %28 = vector.shape_cast %27 : vector<16x8xf32> to vector<1x128xf32>
    %29 = vector.extract_strided_slice %6 {offsets = [0, 128], sizes = [128, 128], strides = [1, 1]} : vector<128x256xf32> to vector<128x128xf32>
    %30 = vector.shape_cast %29 : vector<128x128xf32> to vector<16x8x128xf32>
    %31 = vector.extract_strided_slice %7 {offsets = [1, 0], sizes = [1, 128], strides = [1, 1]} : vector<2x128xf32> to vector<1x128xf32>
    %32 = vector.shape_cast %31 : vector<1x128xf32> to vector<1x1x128xf32>
    %33 = vector.broadcast %32 : vector<1x1x128xf32> to vector<16x8x128xf32>
    %34 = arith.mulf %30, %33 : vector<16x8x128xf32>
    %cst_12 = arith.constant dense<0.000000e+00> : vector<16x8xf32>
    %35 = vector.multi_reduction <add>, %34, %cst_12 [2] : vector<16x8x128xf32> to vector<16x8xf32>
    %36 = vector.extract_strided_slice %8 {offsets = [1, 0], sizes = [1, 1], strides = [1, 1]} : vector<2x1xf32> to vector<1x1xf32>
    %37 = vector.broadcast %36 : vector<1x1xf32> to vector<16x8xf32>
    %38 = arith.addf %35, %37 : vector<16x8xf32>
    %cst_13 = arith.constant dense<0xFF800000> : vector<16xf32>
    %39 = vector.multi_reduction <maximumf>, %38, %cst_13 [1] : vector<16x8xf32> to vector<16xf32>
    %40 = vector.shape_cast %39 : vector<16xf32> to vector<16x1xf32>
    %41 = vector.broadcast %40 : vector<16x1xf32> to vector<16x8xf32>
    %42 = arith.subf %38, %41 : vector<16x8xf32>
    %43 = math.exp %42 : vector<16x8xf32>
    %cst_14 = arith.constant dense<0.000000e+00> : vector<16xf32>
    %44 = vector.multi_reduction <add>, %43, %cst_14 [1] : vector<16x8xf32> to vector<16xf32>
    %45 = vector.shape_cast %44 : vector<16xf32> to vector<16x1xf32>
    %46 = vector.broadcast %45 : vector<16x1xf32> to vector<16x8xf32>
    %47 = arith.divf %43, %46 : vector<16x8xf32>
    %48 = vector.shape_cast %47 : vector<16x8xf32> to vector<1x128xf32>
    %49 = tpu.concatenate %28, %48 in 0 : vector<1x128xf32>, vector<1x128xf32> -> vector<2x128xf32>
    %c0_15 = arith.constant 0 : index
    %c0_16 = arith.constant 0 : index
    %50 = vector.load %arg6[%c0_15, %c0_16] : memref<2x128xf32, #tpu.memory_space<vmem>>, vector<2x128xf32>
    tpu.vector_store %arg6[%c0_15, %c0_16], %49 {strides = array<i32>} : memref<2x128xf32, #tpu.memory_space<vmem>>, vector<2x128xf32>,
    return
  }
  func.func @transform_0(%arg0: i32) -> (i32, i32) {
    %c0_i32 = arith.constant 0 : i32
    %c0_i32_0 = arith.constant 0 : i32
    %c0_i32_1 = arith.constant 0 : i32
    return %c0_i32, %c0_i32_0 : i32, i32
  }
  func.func @transform_1(%arg0: i32) -> (i32, i32) {
    %c0_i32 = arith.constant 0 : i32
    %c0_i32_0 = arith.constant 0 : i32
    %c0_i32_1 = arith.constant 0 : i32
    return %c0_i32, %c0_i32_0 : i32, i32
  }
  func.func @transform_2(%arg0: i32) -> (i32, i32) {
    %c0_i32 = arith.constant 0 : i32
    %c0_i32_0 = arith.constant 0 : i32
    %c0_i32_1 = arith.constant 0 : i32
    return %c0_i32, %c0_i32_0 : i32, i32
  }
  func.func @transform_3(%arg0: i32) -> (i32, i32) {
    %c0_i32 = arith.constant 0 : i32
    %c0_i32_0 = arith.constant 0 : i32
    %c0_i32_1 = arith.constant 0 : i32
    return %c0_i32, %c0_i32_0 : i32, i32
  }
  func.func @transform_4(%arg0: i32) -> (i32, i32) {
    %c0_i32 = arith.constant 0 : i32
    %c0_i32_0 = arith.constant 0 : i32
    %c0_i32_1 = arith.constant 0 : i32
    return %c0_i32, %c0_i32_0 : i32, i32
  }
  func.func @transform_5(%arg0: i32) -> (i32, i32) {
    %c0_i32 = arith.constant 0 : i32
    %c0_i32_0 = arith.constant 0 : i32
    %c0_i32_1 = arith.constant 0 : i32
    return %c0_i32, %c0_i32_0 : i32, i32
  }
}

module attributes {stable_mosaic.version = 11 : i64} {
  func.func @_xe_kernel(%arg0: i32, %arg1: memref<2x16x32xf32, #tpu.memory_space<vmem>>, %arg2: memref<2x16x16xf32, #tpu.memory_space<vmem>>, %arg3: memref<64x32xf32, #tpu.memory_space<vmem>>, %arg4: memref<32x32xf32, #tpu.memory_space<vmem>>, %arg5: memref<1x32xf32, #tpu.memory_space<vmem>>, %arg6: memref<2x16x32xf32, #tpu.memory_space<vmem>>) attributes {dimension_semantics = [#tpu.dimension_semantics<parallel>], iteration_bounds = array<i64: 1>, scalar_prefetch = 0 : i64, scratch_operands = 0 : i64, tpu.core_type = #tpu.core_type<tc>, window_params = [{transform_indices = @transform_0, window_bounds = array<i64: 2, 16, 32>}, {pipeline_mode = #tpu.pipeline_mode<synchronous>, transform_indices = @transform_1, window_bounds = array<i64: 2, 16, 16>}, {pipeline_mode = #tpu.pipeline_mode<synchronous>, transform_indices = @transform_2, window_bounds = array<i64: 64, 32>}, {pipeline_mode = #tpu.pipeline_mode<synchronous>, transform_indices = @transform_3, window_bounds = array<i64: 32, 32>}, {pipeline_mode = #tpu.pipeline_mode<synchronous>, transform_indices = @transform_4, window_bounds = array<i64: 1, 32>}, {transform_indices = @transform_5, window_bounds = array<i64: 2, 16, 32>}]} {
    %c0 = arith.constant 0 : index
    %c0_0 = arith.constant 0 : index
    %c0_1 = arith.constant 0 : index
    %0 = vector.load %arg1[%c0, %c0_0, %c0_1] : memref<2x16x32xf32, #tpu.memory_space<vmem>>, vector<2x16x32xf32>
    %1 = vector.shape_cast %0 : vector<2x16x32xf32> to vector<32x32xf32>
    %c0_2 = arith.constant 0 : index
    %c0_3 = arith.constant 0 : index
    %2 = vector.load %arg4[%c0_2, %c0_3] : memref<32x32xf32, #tpu.memory_space<vmem>>, vector<32x32xf32>
    %cst = arith.constant dense<0.000000e+00> : vector<32x32xf32>
    %3 = tpu.matmul %1, %2, %cst {dimension_numbers = #tpu.dot_dimension_numbers<[1], [0], [0], [1], [0, 0, 1, 1], [], []>} : vector<32x32xf32>, vector<32x32xf32>, vector<32x32xf32> -> vector<32x32xf32>
    %c0_4 = arith.constant 0 : index
    %c0_5 = arith.constant 0 : index
    %c0_6 = arith.constant 0 : index
    %4 = vector.load %arg2[%c0_4, %c0_5, %c0_6] : memref<2x16x16xf32, #tpu.memory_space<vmem>>, vector<1x16x16xf32>
    %5 = vector.shape_cast %4 : vector<1x16x16xf32> to vector<16x16xf32>
    %6 = vector.shape_cast %5 : vector<16x16xf32> to vector<1x16x16xf32>
    %7 = vector.broadcast %6 : vector<1x16x16xf32> to vector<2x16x16xf32>
    "tpu.trace_start"() <{level = 10 : i32, message = "bnk,bkf->bnf"}> : () -> ()
    %cst_7 = arith.constant dense<0.000000e+00> : vector<2x16x32xf32>
    %8 = tpu.matmul %7, %0, %cst_7 {dimension_numbers = #tpu.dot_dimension_numbers<[2], [1], [1], [2], [0, 0, 0, 1, 1, 2], [0], [0]>} : vector<2x16x16xf32>, vector<2x16x32xf32>, vector<2x16x32xf32> -> vector<2x16x32xf32>
    "tpu.trace_stop"() : () -> ()
    %c1 = arith.constant 1 : index
    %c0_8 = arith.constant 0 : index
    %c0_9 = arith.constant 0 : index
    %9 = vector.load %arg2[%c1, %c0_8, %c0_9] : memref<2x16x16xf32, #tpu.memory_space<vmem>>, vector<1x16x16xf32>
    %10 = vector.shape_cast %9 : vector<1x16x16xf32> to vector<16x16xf32>
    %11 = vector.shape_cast %10 : vector<16x16xf32> to vector<1x16x16xf32>
    %12 = vector.broadcast %11 : vector<1x16x16xf32> to vector<2x16x16xf32>
    "tpu.trace_start"() <{level = 10 : i32, message = "bnk,bkf->bnf"}> : () -> ()
    %cst_10 = arith.constant dense<0.000000e+00> : vector<2x16x32xf32>
    %13 = tpu.matmul %12, %0, %cst_10 {dimension_numbers = #tpu.dot_dimension_numbers<[2], [1], [1], [2], [0, 0, 0, 1, 1, 2], [0], [0]>} : vector<2x16x16xf32>, vector<2x16x32xf32>, vector<2x16x32xf32> -> vector<2x16x32xf32>
    "tpu.trace_stop"() : () -> ()
    %14 = tpu.concatenate %8, %13 in 2 : vector<2x16x32xf32>, vector<2x16x32xf32> -> vector<2x16x64xf32>
    %15 = vector.shape_cast %14 : vector<2x16x64xf32> to vector<32x64xf32>
    %c0_11 = arith.constant 0 : index
    %c0_12 = arith.constant 0 : index
    %16 = vector.load %arg3[%c0_11, %c0_12] : memref<64x32xf32, #tpu.memory_space<vmem>>, vector<64x32xf32>
    %cst_13 = arith.constant dense<0.000000e+00> : vector<32x32xf32>
    %17 = tpu.matmul %15, %16, %cst_13 {dimension_numbers = #tpu.dot_dimension_numbers<[1], [0], [0], [1], [0, 0, 1, 1], [], []>} : vector<32x64xf32>, vector<64x32xf32>, vector<32x32xf32> -> vector<32x32xf32>
    %18 = arith.addf %3, %17 : vector<32x32xf32>
    %c0_14 = arith.constant 0 : index
    %c0_15 = arith.constant 0 : index
    %19 = vector.load %arg5[%c0_14, %c0_15] : memref<1x32xf32, #tpu.memory_space<vmem>>, vector<1x32xf32>
    %20 = vector.broadcast %19 : vector<1x32xf32> to vector<32x32xf32>
    %21 = arith.addf %18, %20 : vector<32x32xf32>
    %22 = vector.shape_cast %21 : vector<32x32xf32> to vector<2x16x32xf32>
    %c0_16 = arith.constant 0 : index
    %c0_17 = arith.constant 0 : index
    %c0_18 = arith.constant 0 : index
    %23 = vector.load %arg6[%c0_16, %c0_17, %c0_18] : memref<2x16x32xf32, #tpu.memory_space<vmem>>, vector<2x16x32xf32>
    tpu.vector_store %arg6[%c0_16, %c0_17, %c0_18], %22 {strides = array<i32>} : memref<2x16x32xf32, #tpu.memory_space<vmem>>, vector<2x16x32xf32>,
    return
  }
  func.func @transform_0(%arg0: i32) -> (i32, i32, i32) {
    %c0_i32 = arith.constant 0 : i32
    %c0_i32_0 = arith.constant 0 : i32
    %c0_i32_1 = arith.constant 0 : i32
    return %arg0, %c0_i32, %c0_i32_0 : i32, i32, i32
  }
  func.func @transform_1(%arg0: i32) -> (i32, i32, i32) {
    %c0_i32 = arith.constant 0 : i32
    %c0_i32_0 = arith.constant 0 : i32
    %c0_i32_1 = arith.constant 0 : i32
    %c0_i32_2 = arith.constant 0 : i32
    return %c0_i32, %c0_i32_0, %c0_i32_1 : i32, i32, i32
  }
  func.func @transform_2(%arg0: i32) -> (i32, i32) {
    %c0_i32 = arith.constant 0 : i32
    %c0_i32_0 = arith.constant 0 : i32
    %c0_i32_1 = arith.constant 0 : i32
    return %c0_i32, %c0_i32_0 : i32, i32
  }
  func.func @transform_3(%arg0: i32) -> (i32, i32) {
    %c0_i32 = arith.constant 0 : i32
    %c0_i32_0 = arith.constant 0 : i32
    %c0_i32_1 = arith.constant 0 : i32
    return %c0_i32, %c0_i32_0 : i32, i32
  }
  func.func @transform_4(%arg0: i32) -> (i32, i32) {
    %c0_i32 = arith.constant 0 : i32
    %c0_i32_0 = arith.constant 0 : i32
    %c0_i32_1 = arith.constant 0 : i32
    return %c0_i32, %c0_i32_0 : i32, i32
  }
  func.func @transform_5(%arg0: i32) -> (i32, i32, i32) {
    %c0_i32 = arith.constant 0 : i32
    %c0_i32_0 = arith.constant 0 : i32
    %c0_i32_1 = arith.constant 0 : i32
    return %arg0, %c0_i32, %c0_i32_0 : i32, i32, i32
  }
}

</mosaic_0001>

<llo_original>
// kernel: graph_conv_forward.3
$region0: #{graph_conv_forward.3}
  #allocation0 [shape = 'u32[]', space=smem, size = 0x4, offset = 0x4, fixed_abs, tag = 'smem constant byte address 0x4 - core index']
  #allocation1 [shape = 'u32[144,128]{1,0:T(1,128)}', space=vmem, size = 0x12000, scoped, tag = 'internal scratch']
  %s0 = inlined_call_operand.vmem [shape: f32[2,16,32], index: 0, kind: input, shape index: {}]
  %s1 = inlined_call_operand.vmem [shape: f32[2,16,16], index: 1, kind: input, shape index: {}]
  %s2 = inlined_call_operand.vmem [shape: f32[64,32], index: 2, kind: input, shape index: {}]
  %s3 = inlined_call_operand.vmem [shape: f32[32,32], index: 3, kind: input, shape index: {}]
  %s4 = inlined_call_operand.vmem [shape: f32[1,32], index: 4, kind: input, shape index: {}]
  %s5 = inlined_call_operand.hbm [shape: f32[2,16,32], index: 5, kind: output, shape index: {}]
  %s6 = sld [smem:[#allocation0]]
  $region30: #{graph_conv_forward.3} parent=0
    _
  %s8 = ssub.s32 1, %s6
  %s9 = scalar_select 0, %s8, %s6
  $region1: #{graph_conv_forward.3} parent=0
    #allocation2 [shape = 'u8[16384]{0}', space=vmem, size = 0x4000, scoped, tag = 'output window, operand 0, single buffered']
    #allocation3 [shape = 's32[1]{0}', space=sflag, size = 0x4, scoped, tag = 'scoped memory for graph_conv_forward.3']
    %10 = vsyncpa [#allocation3], 0
    // Predicated region
    $region2: #{graph_conv_forward.3} parent=1 // pred_check
      _
    $region3: #{graph_conv_forward.3} parent=1 // pred_check_branch
      %12 = sbr.rel (0) target = $region5
    $region4: #{graph_conv_forward.3} parent=1 // pred_region
      _
    $region5: #{graph_conv_forward.3} parent=1 // pred_fallthru
      _
    // Predicated region
    $region6: #{graph_conv_forward.3} parent=1 // pred_check
      _
    $region7: #{graph_conv_forward.3} parent=1 // pred_check_branch
      %14 = sbr.rel (0) target = $region9
    $region8: #{graph_conv_forward.3} parent=1 // pred_region
      _
    $region9: #{graph_conv_forward.3} parent=1 // pred_fallthru
      _
    // Predicated region
    $region10: #{graph_conv_forward.3} parent=1 // pred_check
      _
    $region11: #{graph_conv_forward.3} parent=1 // pred_check_branch
      %16 = sbr.rel (0) target = $region13
    $region12: #{graph_conv_forward.3} parent=1 // pred_region
      _
    $region13: #{graph_conv_forward.3} parent=1 // pred_fallthru
      _
    // Predicated region
    $region14: #{graph_conv_forward.3} parent=1 // pred_check
      _
    $region15: #{graph_conv_forward.3} parent=1 // pred_check_branch
      %18 = sbr.rel (0) target = $region17
    $region16: #{graph_conv_forward.3} parent=1 // pred_region
      _
    $region17: #{graph_conv_forward.3} parent=1 // pred_fallthru
      _
    // Predicated region
    $region18: #{graph_conv_forward.3} parent=1 // pred_check
      _
    $region19: #{graph_conv_forward.3} parent=1 // pred_check_branch
      %20 = sbr.rel (0) target = $region21
    $region20: #{graph_conv_forward.3} parent=1 // pred_region
      _
    $region21: #{graph_conv_forward.3} parent=1 // pred_fallthru
      _
    %v21 = vld [vmem:[%s0] sm:$0xff]
    %v22 = vld [vmem:[%s0 + $0x8] sm:$0xff]
    %v23 = vld [vmem:[%s0 + $0x10] sm:$0xff]
    %v24 = vld [vmem:[%s0 + $0x18] sm:$0xff]
    %v25 = vld [vmem:[%s3] sm:$0xff]
    %v26 = vld [vmem:[%s3 + $0x8] sm:$0xff]
    %v27 = vld [vmem:[%s3 + $0x10] sm:$0xff]
    %v28 = vld [vmem:[%s3 + $0x18] sm:$0xff]
    %v29 = vld [vmem:[%s1] sm:$0xff]
    %v30 = vld [vmem:[%s1 + $0x8] sm:$0xff]
    %vm31 = vcmask 130048
    %v33 = vsel %vm31, %v29, 0
    %v36 = vsel %vm31, %v30, 0
    %38 = vmatprep.subr.mxu0 0.0
    %39 = vmatpush1.msra.mxu0 %v21
    %40 = vmatprep.subr.mxu0 0.0
    %41 = vmatpush1.msra.mxu0 %v22
    %42 = vmatprep.subr.mxu0 0.0
    %43 = vmatpush1.msra.mxu0 0.0
    %44 = vmatprep.subr.mxu0 0.0
    %45 = vmatpush1.msra.mxu0 0.0
    %46 = vmatprep.subr.mxu0 0.0
    %47 = vmatpush1.msra.mxu0 0.0
    %48 = vmatprep.subr.mxu0 0.0
    %49 = vmatpush1.msra.mxu0 0.0
    %50 = vmatprep.subr.mxu0 0.0
    %51 = vmatpush1.msra.mxu0 0.0
    %52 = vmatprep.subr.mxu0 0.0
    %53 = vmatpush1.msra.mxu0 0.0
    %54 = vmatprep.subr.mxu0 0.0
    %55 = vmatpush1.msra.mxu0 0.0
    %56 = vmatprep.subr.mxu0 0.0
    %57 = vmatpush1.msra.mxu0 0.0
    %58 = vmatprep.subr.mxu0 0.0
    %59 = vmatpush1.msra.mxu0 0.0
    %60 = vmatprep.subr.mxu0 0.0
    %61 = vmatpush1.msra.mxu0 0.0
    %62 = vmatprep.subr.mxu0 0.0
    %63 = vmatpush1.msra.mxu0 0.0
    %64 = vmatprep.subr.mxu0 0.0
    %65 = vmatpush1.msra.mxu0 0.0
    %66 = vmatprep.subr.mxu0 0.0
    %67 = vmatpush1.msra.mxu0 0.0
    %68 = vmatprep.subr.mxu0 0.0
    %69 = vmatpush1.msra.mxu0 0.0
    %70 = vmatprep.subr.mxu0 0.0
    %71 = vmatpush1.msra.mxu0 0.0
    %72 = vmatprep.subr.mxu0 0.0
    %73 = vmatpush1.msra.mxu0 0.0
    %74 = vmatprep.subr.mxu0 0.0
    %75 = vmatpush1.msra.mxu0 0.0
    %76 = vmatprep.subr.mxu0 0.0
    %77 = vmatpush1.msra.mxu0 0.0
    %78 = vmatprep.subr.mxu0 0.0
    %79 = vmatpush1.msra.mxu0 0.0
    %80 = vmatprep.subr.mxu0 0.0
    %81 = vmatpush1.msra.mxu0 0.0
    %82 = vmatprep.subr.mxu0 0.0
    %83 = vmatpush1.msra.mxu0 0.0
    %84 = vmatprep.subr.mxu0 0.0
    %85 = vmatpush1.msra.mxu0 0.0
    %86 = vmatprep.subr.mxu0 0.0
    %87 = vmatpush1.msra.mxu0 0.0
    %88 = vmatprep.subr.mxu0 0.0
    %89 = vmatpush1.msra.mxu0 0.0
    %90 = vmatprep.subr.mxu0 0.0
    %91 = vmatpush1.msra.mxu0 0.0
    %92 = vmatprep.subr.mxu0 0.0
    %93 = vmatpush1.msra.mxu0 0.0
    %94 = vmatprep.subr.mxu0 0.0
    %95 = vmatpush1.msra.mxu0 0.0
    %96 = vmatprep.subr.mxu0 0.0
    %97 = vmatpush1.msra.mxu0 0.0
    %98 = vmatprep.subr.mxu0 0.0
    %99 = vmatpush1.msra.mxu0 0.0
    %100 = vmatprep.subr.mxu0 0.0
    %101 = vmatpush1.msra.mxu0 0.0
    %102 = vmatprep.mubr.f32.mxu0 0.0
    %103 = vmatmul.mubr.f32.gmra.mrb[0].mxu0 %v33
    %v104 = vpop.f32.mrb[0].mxu0
    %v105 = vadd.f32 0.0, %v104
    %v106 = vpop.f32.mrb[0].mxu0
    %107 = vmatprep.mubr.f32.mxu0 0.0
    %108 = vmatmul.mubr.f32.gmra.mrb[0].mxu0 %v36
    %v109 = vpop.f32.mrb[0].mxu0
    %v110 = vadd.f32 0.0, %v109
    %v111 = vpop.f32.mrb[0].mxu0
    %112 = vdwg.mxu0
    %113 = vmatprep.subr.mxu0 0.0
    %114 = vmatpush1.msra.mxu0 %v23
    %115 = vmatprep.subr.mxu0 0.0
    %116 = vmatpush1.msra.mxu0 %v24
    %117 = vmatprep.subr.mxu0 0.0
    %118 = vmatpush1.msra.mxu0 0.0
    %119 = vmatprep.subr.mxu0 0.0
    %120 = vmatpush1.msra.mxu0 0.0
    %121 = vmatprep.subr.mxu0 0.0
    %122 = vmatpush1.msra.mxu0 0.0
    %123 = vmatprep.subr.mxu0 0.0
    %124 = vmatpush1.msra.mxu0 0.0
    %125 = vmatprep.subr.mxu0 0.0
    %126 = vmatpush1.msra.mxu0 0.0
    %127 = vmatprep.subr.mxu0 0.0
    %128 = vmatpush1.msra.mxu0 0.0
    %129 = vmatprep.subr.mxu0 0.0
    %130 = vmatpush1.msra.mxu0 0.0
    %131 = vmatprep.subr.mxu0 0.0
    %132 = vmatpush1.msra.mxu0 0.0
    %133 = vmatprep.subr.mxu0 0.0
    %134 = vmatpush1.msra.mxu0 0.0
    %135 = vmatprep.subr.mxu0 0.0
    %136 = vmatpush1.msra.mxu0 0.0
    %137 = vmatprep.subr.mxu0 0.0
    %138 = vmatpush1.msra.mxu0 0.0
    %139 = vmatprep.subr.mxu0 0.0
    %140 = vmatpush1.msra.mxu0 0.0
    %141 = vmatprep.subr.mxu0 0.0
    %142 = vmatpush1.msra.mxu0 0.0
    %143 = vmatprep.subr.mxu0 0.0
    %144 = vmatpush1.msra.mxu0 0.0
    %145 = vmatprep.subr.mxu0 0.0
    %146 = vmatpush1.msra.mxu0 0.0
    %147 = vmatprep.subr.mxu0 0.0
    %148 = vmatpush1.msra.mxu0 0.0
    %149 = vmatprep.subr.mxu0 0.0
    %150 = vmatpush1.msra.mxu0 0.0
    %151 = vmatprep.subr.mxu0 0.0
    %152 = vmatpush1.msra.mxu0 0.0
    %153 = vmatprep.subr.mxu0 0.0
    %154 = vmatpush1.msra.mxu0 0.0
    %155 = vmatprep.subr.mxu0 0.0
    %156 = vmatpush1.msra.mxu0 0.0
    %157 = vmatprep.subr.mxu0 0.0
    %158 = vmatpush1.msra.mxu0 0.0
    %159 = vmatprep.subr.mxu0 0.0
    %160 = vmatpush1.msra.mxu0 0.0
    %161 = vmatprep.subr.mxu0 0.0
    %162 = vmatpush1.msra.mxu0 0.0
    %163 = vmatprep.subr.mxu0 0.0
    %164 = vmatpush1.msra.mxu0 0.0
    %165 = vmatprep.subr.mxu0 0.0
    %166 = vmatpush1.msra.mxu0 0.0
    %167 = vmatprep.subr.mxu0 0.0
    %168 = vmatpush1.msra.mxu0 0.0
    %169 = vmatprep.subr.mxu0 0.0
    %170 = vmatpush1.msra.mxu0 0.0
    %171 = vmatprep.subr.mxu0 0.0
    %172 = vmatpush1.msra.mxu0 0.0
    %173 = vmatprep.subr.mxu0 0.0
    %174 = vmatpush1.msra.mxu0 0.0
    %175 = vmatprep.subr.mxu0 0.0
    %176 = vmatpush1.msra.mxu0 0.0
    %177 = vmatprep.mubr.f32.mxu0 0.0
    %178 = vmatmul.mubr.f32.gmra.mrb[0].mxu0 %v33
    %v179 = vpop.f32.mrb[0].mxu0
    %v180 = vadd.f32 0.0, %v179
    %v181 = vpop.f32.mrb[0].mxu0
    %182 = vmatprep.mubr.f32.mxu0 0.0
    %183 = vmatmul.mubr.f32.gmra.mrb[0].mxu0 %v36
    %v184 = vpop.f32.mrb[0].mxu0
    %v185 = vadd.f32 0.0, %v184
    %v186 = vpop.f32.mrb[0].mxu0
    %187 = vdwg.mxu0
    %s188 = scalar_lea.vmem %s1, 16
    %v189 = vld [vmem:[%s188] sm:$0xff]
    %v190 = vld [vmem:[%s188 + $0x8] sm:$0xff]
    %v192 = vsel %vm31, %v189, 0
    %v195 = vsel %vm31, %v190, 0
    %197 = vmatprep.subr.mxu0 0.0
    %198 = vmatpush1.msra.mxu0 %v21
    %199 = vmatprep.subr.mxu0 0.0
    %200 = vmatpush1.msra.mxu0 %v22
    %201 = vmatprep.subr.mxu0 0.0
    %202 = vmatpush1.msra.mxu0 0.0
    %203 = vmatprep.subr.mxu0 0.0
    %204 = vmatpush1.msra.mxu0 0.0
    %205 = vmatprep.subr.mxu0 0.0
    %206 = vmatpush1.msra.mxu0 0.0
    %207 = vmatprep.subr.mxu0 0.0
    %208 = vmatpush1.msra.mxu0 0.0
    %209 = vmatprep.subr.mxu0 0.0
    %210 = vmatpush1.msra.mxu0 0.0
    %211 = vmatprep.subr.mxu0 0.0
    %212 = vmatpush1.msra.mxu0 0.0
    %213 = vmatprep.subr.mxu0 0.0
    %214 = vmatpush1.msra.mxu0 0.0
    %215 = vmatprep.subr.mxu0 0.0
    %216 = vmatpush1.msra.mxu0 0.0
    %217 = vmatprep.subr.mxu0 0.0
    %218 = vmatpush1.msra.mxu0 0.0
    %219 = vmatprep.subr.mxu0 0.0
    %220 = vmatpush1.msra.mxu0 0.0
    %221 = vmatprep.subr.mxu0 0.0
    %222 = vmatpush1.msra.mxu0 0.0
    %223 = vmatprep.subr.mxu0 0.0
    %224 = vmatpush1.msra.mxu0 0.0
    %225 = vmatprep.subr.mxu0 0.0
    %226 = vmatpush1.msra.mxu0 0.0
    %227 = vmatprep.subr.mxu0 0.0
    %228 = vmatpush1.msra.mxu0 0.0
    %229 = vmatprep.subr.mxu0 0.0
    %230 = vmatpush1.msra.mxu0 0.0
    %231 = vmatprep.subr.mxu0 0.0
    %232 = vmatpush1.msra.mxu0 0.0
    %233 = vmatprep.subr.mxu0 0.0
    %234 = vmatpush1.msra.mxu0 0.0
    %235 = vmatprep.subr.mxu0 0.0
    %236 = vmatpush1.msra.mxu0 0.0
    %237 = vmatprep.subr.mxu0 0.0
    %238 = vmatpush1.msra.mxu0 0.0
    %239 = vmatprep.subr.mxu0 0.0
    %240 = vmatpush1.msra.mxu0 0.0
    %241 = vmatprep.subr.mxu0 0.0
    %242 = vmatpush1.msra.mxu0 0.0
    %243 = vmatprep.subr.mxu0 0.0
    %244 = vmatpush1.msra.mxu0 0.0
    %245 = vmatprep.subr.mxu0 0.0
    %246 = vmatpush1.msra.mxu0 0.0
    %247 = vmatprep.subr.mxu0 0.0
    %248 = vmatpush1.msra.mxu0 0.0
    %249 = vmatprep.subr.mxu0 0.0
    %250 = vmatpush1.msra.mxu0 0.0
    %251 = vmatprep.subr.mxu0 0.0
    %252 = vmatpush1.msra.mxu0 0.0
    %253 = vmatprep.subr.mxu0 0.0
    %254 = vmatpush1.msra.mxu0 0.0
    %255 = vmatprep.subr.mxu0 0.0
    %256 = vmatpush1.msra.mxu0 0.0
    %257 = vmatprep.subr.mxu0 0.0
    %258 = vmatpush1.msra.mxu0 0.0
    %259 = vmatprep.subr.mxu0 0.0
    %260 = vmatpush1.msra.mxu0 0.0
    %261 = vmatprep.mubr.f32.mxu0 0.0
    %262 = vmatmul.mubr.f32.gmra.mrb[0].mxu0 %v192
    %v263 = vpop.f32.mrb[0].mxu0
    %v264 = vadd.f32 0.0, %v263
    %v265 = vpop.f32.mrb[0].mxu0
    %266 = vmatprep.mubr.f32.mxu0 0.0
    %267 = vmatmul.mubr.f32.gmra.mrb[0].mxu0 %v195
    %v268 = vpop.f32.mrb[0].mxu0
    %v269 = vadd.f32 0.0, %v268
    %v270 = vpop.f32.mrb[0].mxu0
    %271 = vdwg.mxu0
    %272 = vmatprep.subr.mxu0 0.0
    %273 = vmatpush1.msra.mxu0 %v23
    %274 = vmatprep.subr.mxu0 0.0
    %275 = vmatpush1.msra.mxu0 %v24
    %276 = vmatprep.subr.mxu0 0.0
    %277 = vmatpush1.msra.mxu0 0.0
    %278 = vmatprep.subr.mxu0 0.0
    %279 = vmatpush1.msra.mxu0 0.0
    %280 = vmatprep.subr.mxu0 0.0
    %281 = vmatpush1.msra.mxu0 0.0
    %282 = vmatprep.subr.mxu0 0.0
    %283 = vmatpush1.msra.mxu0 0.0
    %284 = vmatprep.subr.mxu0 0.0
    %285 = vmatpush1.msra.mxu0 0.0
    %286 = vmatprep.subr.mxu0 0.0
    %287 = vmatpush1.msra.mxu0 0.0
    %288 = vmatprep.subr.mxu0 0.0
    %289 = vmatpush1.msra.mxu0 0.0
    %290 = vmatprep.subr.mxu0 0.0
    %291 = vmatpush1.msra.mxu0 0.0
    %292 = vmatprep.subr.mxu0 0.0
    %293 = vmatpush1.msra.mxu0 0.0
    %294 = vmatprep.subr.mxu0 0.0
    %295 = vmatpush1.msra.mxu0 0.0
    %296 = vmatprep.subr.mxu0 0.0
    %297 = vmatpush1.msra.mxu0 0.0
    %298 = vmatprep.subr.mxu0 0.0
    %299 = vmatpush1.msra.mxu0 0.0
    %300 = vmatprep.subr.mxu0 0.0
    %301 = vmatpush1.msra.mxu0 0.0
    %302 = vmatprep.subr.mxu0 0.0
    %303 = vmatpush1.msra.mxu0 0.0
    %304 = vmatprep.subr.mxu0 0.0
    %305 = vmatpush1.msra.mxu0 0.0
    %306 = vmatprep.subr.mxu0 0.0
    %307 = vmatpush1.msra.mxu0 0.0
    %308 = vmatprep.subr.mxu0 0.0
    %309 = vmatpush1.msra.mxu0 0.0
    %310 = vmatprep.subr.mxu0 0.0
    %311 = vmatpush1.msra.mxu0 0.0
    %312 = vmatprep.subr.mxu0 0.0
    %313 = vmatpush1.msra.mxu0 0.0
    %314 = vmatprep.subr.mxu0 0.0
    %315 = vmatpush1.msra.mxu0 0.0
    %316 = vmatprep.subr.mxu0 0.0
    %317 = vmatpush1.msra.mxu0 0.0
    %318 = vmatprep.subr.mxu0 0.0
    %319 = vmatpush1.msra.mxu0 0.0
    %320 = vmatprep.subr.mxu0 0.0
    %321 = vmatpush1.msra.mxu0 0.0
    %322 = vmatprep.subr.mxu0 0.0
    %323 = vmatpush1.msra.mxu0 0.0
    %324 = vmatprep.subr.mxu0 0.0
    %325 = vmatpush1.msra.mxu0 0.0
    %326 = vmatprep.subr.mxu0 0.0
    %327 = vmatpush1.msra.mxu0 0.0
    %328 = vmatprep.subr.mxu0 0.0
    %329 = vmatpush1.msra.mxu0 0.0
    %330 = vmatprep.subr.mxu0 0.0
    %331 = vmatpush1.msra.mxu0 0.0
    %332 = vmatprep.subr.mxu0 0.0
    %333 = vmatpush1.msra.mxu0 0.0
    %334 = vmatprep.subr.mxu0 0.0
    %335 = vmatpush1.msra.mxu0 0.0
    %336 = vmatprep.mubr.f32.mxu0 0.0
    %337 = vmatmul.mubr.f32.gmra.mrb[0].mxu0 %v192
    %v338 = vpop.f32.mrb[0].mxu0
    %v339 = vadd.f32 0.0, %v338
    %v340 = vpop.f32.mrb[0].mxu0
    %341 = vmatprep.mubr.f32.mxu0 0.0
    %342 = vmatmul.mubr.f32.gmra.mrb[0].mxu0 %v195
    %v343 = vpop.f32.mrb[0].mxu0
    %v344 = vadd.f32 0.0, %v343
    %v345 = vpop.f32.mrb[0].mxu0
    %346 = vdwg.mxu0
    %351 = vrot.lane.b32.xlu0 %v264, 32
    %v352 = vpop.permute.xlu0 %351
    %353 = vrot.lane.b32.xlu0 %v269, 32
    %v354 = vpop.permute.xlu0 %353
    %355 = vrot.lane.b32.xlu0 %v339, 32
    %v356 = vpop.permute.xlu0 %355
    %357 = vrot.lane.b32.xlu0 %v344, 32
    %v358 = vpop.permute.xlu0 %357
    %vm363 = vcmask 261120
    %v364 = vsel %vm363, %v105, %v352
    %v365 = vsel %vm363, %v110, %v354
    %v366 = vsel %vm363, %v180, %v356
    %v367 = vsel %vm363, %v185, %v358
    %v368 = vld [vmem:[%s2] sm:$0xff]
    %v369 = vld [vmem:[%s2 + $0x8] sm:$0xff]
    %v370 = vld [vmem:[%s2 + $0x10] sm:$0xff]
    %v371 = vld [vmem:[%s2 + $0x18] sm:$0xff]
    %v372 = vld [vmem:[%s2 + $0x20] sm:$0xff]
    %v373 = vld [vmem:[%s2 + $0x28] sm:$0xff]
    %v374 = vld [vmem:[%s2 + $0x30] sm:$0xff]
    %v375 = vld [vmem:[%s2 + $0x38] sm:$0xff]
    %vm376 = vcmask 523264
    %v378 = vsel %vm376, %v364, 0
    %v381 = vsel %vm376, %v365, 0
    %v384 = vsel %vm376, %v366, 0
    %v387 = vsel %vm376, %v367, 0
    %389 = vmatprep.subr.mxu0 0.0
    %390 = vmatpush1.msra.mxu0 %v368
    %391 = vmatprep.subr.mxu0 0.0
    %392 = vmatpush1.msra.mxu0 %v369
    %393 = vmatprep.subr.mxu0 0.0
    %394 = vmatpush1.msra.mxu0 %v370
    %395 = vmatprep.subr.mxu0 0.0
    %396 = vmatpush1.msra.mxu0 %v371
    %397 = vmatprep.subr.mxu0 0.0
    %398 = vmatpush1.msra.mxu0 %v372
    %399 = vmatprep.subr.mxu0 0.0
    %400 = vmatpush1.msra.mxu0 %v373
    %401 = vmatprep.subr.mxu0 0.0
    %402 = vmatpush1.msra.mxu0 %v374
    %403 = vmatprep.subr.mxu0 0.0
    %404 = vmatpush1.msra.mxu0 %v375
    %405 = vmatprep.subr.mxu0 0.0
    %406 = vmatpush1.msra.mxu0 0.0
    %407 = vmatprep.subr.mxu0 0.0
    %408 = vmatpush1.msra.mxu0 0.0
    %409 = vmatprep.subr.mxu0 0.0
    %410 = vmatpush1.msra.mxu0 0.0
    %411 = vmatprep.subr.mxu0 0.0
    %412 = vmatpush1.msra.mxu0 0.0
    %413 = vmatprep.subr.mxu0 0.0
    %414 = vmatpush1.msra.mxu0 0.0
    %415 = vmatprep.subr.mxu0 0.0
    %416 = vmatpush1.msra.mxu0 0.0
    %417 = vmatprep.subr.mxu0 0.0
    %418 = vmatpush1.msra.mxu0 0.0
    %419 = vmatprep.subr.mxu0 0.0
    %420 = vmatpush1.msra.mxu0 0.0
    %421 = vmatprep.subr.mxu0 0.0
    %422 = vmatpush1.msra.mxu0 0.0
    %423 = vmatprep.subr.mxu0 0.0
    %424 = vmatpush1.msra.mxu0 0.0
    %425 = vmatprep.subr.mxu0 0.0
    %426 = vmatpush1.msra.mxu0 0.0
    %427 = vmatprep.subr.mxu0 0.0
    %428 = vmatpush1.msra.mxu0 0.0
    %429 = vmatprep.subr.mxu0 0.0
    %430 = vmatpush1.msra.mxu0 0.0
    %431 = vmatprep.subr.mxu0 0.0
    %432 = vmatpush1.msra.mxu0 0.0
    %433 = vmatprep.subr.mxu0 0.0
    %434 = vmatpush1.msra.mxu0 0.0
    %435 = vmatprep.subr.mxu0 0.0
    %436 = vmatpush1.msra.mxu0 0.0
    %437 = vmatprep.subr.mxu0 0.0
    %438 = vmatpush1.msra.mxu0 0.0
    %439 = vmatprep.subr.mxu0 0.0
    %440 = vmatpush1.msra.mxu0 0.0
    %441 = vmatprep.subr.mxu0 0.0
    %442 = vmatpush1.msra.mxu0 0.0
    %443 = vmatprep.subr.mxu0 0.0
    %444 = vmatpush1.msra.mxu0 0.0
    %445 = vmatprep.subr.mxu0 0.0
    %446 = vmatpush1.msra.mxu0 0.0
    %447 = vmatprep.subr.mxu0 0.0
    %448 = vmatpush1.msra.mxu0 0.0
    %449 = vmatprep.subr.mxu0 0.0
    %450 = vmatpush1.msra.mxu0 0.0
    %451 = vmatprep.subr.mxu0 0.0
    %452 = vmatpush1.msra.mxu0 0.0
    %453 = vmatprep.mubr.f32.mxu0 0.0
    %454 = vmatmul.mubr.f32.gmra.mrb[0].mxu0 %v378
    %v455 = vpop.f32.mrb[0].mxu0
    %v456 = vadd.f32 0.0, %v455
    %v457 = vpop.f32.mrb[0].mxu0
    %458 = vmatprep.mubr.f32.mxu0 0.0
    %459 = vmatmul.mubr.f32.gmra.mrb[0].mxu0 %v381
    %v460 = vpop.f32.mrb[0].mxu0
    %v461 = vadd.f32 0.0, %v460
    %v462 = vpop.f32.mrb[0].mxu0
    %463 = vmatprep.mubr.f32.mxu0 0.0
    %464 = vmatmul.mubr.f32.gmra.mrb[0].mxu0 %v384
    %v465 = vpop.f32.mrb[0].mxu0
    %v466 = vadd.f32 0.0, %v465
    %v467 = vpop.f32.mrb[0].mxu0
    %468 = vmatprep.mubr.f32.mxu0 0.0
    %469 = vmatmul.mubr.f32.gmra.mrb[0].mxu0 %v387
    %v470 = vpop.f32.mrb[0].mxu0
    %v471 = vadd.f32 0.0, %v470
    %v472 = vpop.f32.mrb[0].mxu0
    %473 = vdwg.mxu0
    %v475 = vsel %vm363, %v21, 0
    %v478 = vsel %vm363, %v22, 0
    %v481 = vsel %vm363, %v23, 0
    %v484 = vsel %vm363, %v24, 0
    %486 = vmatprep.subr.mxu0 0.0
    %487 = vmatpush1.msra.mxu0 %v25
    %488 = vmatprep.subr.mxu0 0.0
    %489 = vmatpush1.msra.mxu0 %v26
    %490 = vmatprep.subr.mxu0 0.0
    %491 = vmatpush1.msra.mxu0 %v27
    %492 = vmatprep.subr.mxu0 0.0
    %493 = vmatpush1.msra.mxu0 %v28
    %494 = vmatprep.subr.mxu0 0.0
    %495 = vmatpush1.msra.mxu0 0.0
    %496 = vmatprep.subr.mxu0 0.0
    %497 = vmatpush1.msra.mxu0 0.0
    %498 = vmatprep.subr.mxu0 0.0
    %499 = vmatpush1.msra.mxu0 0.0
    %500 = vmatprep.subr.mxu0 0.0
    %501 = vmatpush1.msra.mxu0 0.0
    %502 = vmatprep.subr.mxu0 0.0
    %503 = vmatpush1.msra.mxu0 0.0
    %504 = vmatprep.subr.mxu0 0.0
    %505 = vmatpush1.msra.mxu0 0.0
    %506 = vmatprep.subr.mxu0 0.0
    %507 = vmatpush1.msra.mxu0 0.0
    %508 = vmatprep.subr.mxu0 0.0
    %509 = vmatpush1.msra.mxu0 0.0
    %510 = vmatprep.subr.mxu0 0.0
    %511 = vmatpush1.msra.mxu0 0.0
    %512 = vmatprep.subr.mxu0 0.0
    %513 = vmatpush1.msra.mxu0 0.0
    %514 = vmatprep.subr.mxu0 0.0
    %515 = vmatpush1.msra.mxu0 0.0
    %516 = vmatprep.subr.mxu0 0.0
    %517 = vmatpush1.msra.mxu0 0.0
    %518 = vmatprep.subr.mxu0 0.0
    %519 = vmatpush1.msra.mxu0 0.0
    %520 = vmatprep.subr.mxu0 0.0
    %521 = vmatpush1.msra.mxu0 0.0
    %522 = vmatprep.subr.mxu0 0.0
    %523 = vmatpush1.msra.mxu0 0.0
    %524 = vmatprep.subr.mxu0 0.0
    %525 = vmatpush1.msra.mxu0 0.0
    %526 = vmatprep.subr.mxu0 0.0
    %527 = vmatpush1.msra.mxu0 0.0
    %528 = vmatprep.subr.mxu0 0.0
    %529 = vmatpush1.msra.mxu0 0.0
    %530 = vmatprep.subr.mxu0 0.0
    %531 = vmatpush1.msra.mxu0 0.0
    %532 = vmatprep.subr.mxu0 0.0
    %533 = vmatpush1.msra.mxu0 0.0
    %534 = vmatprep.subr.mxu0 0.0
    %535 = vmatpush1.msra.mxu0 0.0
    %536 = vmatprep.subr.mxu0 0.0
    %537 = vmatpush1.msra.mxu0 0.0
    %538 = vmatprep.subr.mxu0 0.0
    %539 = vmatpush1.msra.mxu0 0.0
    %540 = vmatprep.subr.mxu0 0.0
    %541 = vmatpush1.msra.mxu0 0.0
    %542 = vmatprep.subr.mxu0 0.0
    %543 = vmatpush1.msra.mxu0 0.0
    %544 = vmatprep.subr.mxu0 0.0
    %545 = vmatpush1.msra.mxu0 0.0
    %546 = vmatprep.subr.mxu0 0.0
    %547 = vmatpush1.msra.mxu0 0.0
    %548 = vmatprep.subr.mxu0 0.0
    %549 = vmatpush1.msra.mxu0 0.0
    %550 = vmatprep.mubr.f32.mxu0 0.0
    %551 = vmatmul.mubr.f32.gmra.mrb[0].mxu0 %v475
    %v552 = vpop.f32.mrb[0].mxu0
    %v553 = vadd.f32 %v456, %v552
    %v554 = vpop.f32.mrb[0].mxu0
    %555 = vmatprep.mubr.f32.mxu0 0.0
    %556 = vmatmul.mubr.f32.gmra.mrb[0].mxu0 %v478
    %v557 = vpop.f32.mrb[0].mxu0
    %v558 = vadd.f32 %v461, %v557
    %v559 = vpop.f32.mrb[0].mxu0
    %560 = vmatprep.mubr.f32.mxu0 0.0
    %561 = vmatmul.mubr.f32.gmra.mrb[0].mxu0 %v481
    %v562 = vpop.f32.mrb[0].mxu0
    %v563 = vadd.f32 %v466, %v562
    %v564 = vpop.f32.mrb[0].mxu0
    %565 = vmatprep.mubr.f32.mxu0 0.0
    %566 = vmatmul.mubr.f32.gmra.mrb[0].mxu0 %v484
    %v567 = vpop.f32.mrb[0].mxu0
    %v568 = vadd.f32 %v471, %v567
    %v569 = vpop.f32.mrb[0].mxu0
    %570 = vdwg.mxu0
    %v571 = vld [vmem:[%s4] sm:$0x1]
    %v573 = vlaneseq
    %v574 = vshrl.u32 %v573, 7
    %v575 = vsub.s32 0, %v574
    %v576 = vrot.slane %v571, %v575
    %v578 = vadd.f32 %v553, %v576
    %v579 = vadd.f32 %v558, %v576
    %v580 = vadd.f32 %v563, %v576
    %v581 = vadd.f32 %v568, %v576
    %582 = vst.msk [vmem:[#allocation2] sm:$0xff] %vm363, %v578
    %583 = vst.msk [vmem:[#allocation2 + $0x8] sm:$0xff] %vm363, %v579
    %584 = vst.msk [vmem:[#allocation2 + $0x10] sm:$0xff] %vm363, %v580
    %585 = vst.msk [vmem:[#allocation2 + $0x18] sm:$0xff] %vm363, %v581
    // Predicated region
    $region22: #{graph_conv_forward.3} parent=1 // pred_check
      _
    $region23: #{graph_conv_forward.3} parent=1 // pred_check_branch
      %587 = sbr.rel (0) target = $region25
    $region24: #{graph_conv_forward.3} parent=1 // pred_region
      %s589 = ssub.s32 512, 512
      %590 = vsyncadd [#allocation3], %s589
      %s591 = sshll.u32 [#allocation2], 4
      %s592 = int_to_ptr.vmem [resolvable:$true] %s591
      %597 = dma.vmem_to_hbm [thread:$0]  %s592, 512, %s5, [#allocation3], 128, 128, 8
    $region25: #{graph_conv_forward.3} parent=1 // pred_fallthru
      _
    // Predicated region
    $region26: #{graph_conv_forward.3} parent=1 // pred_check
      _
    $region27: #{graph_conv_forward.3} parent=1 // pred_check_branch
      %599 = sbr.rel (0) target = $region29
    $region28: #{graph_conv_forward.3} parent=1 // pred_region
      %600 = dma.done [#allocation3], 512
    $region29: #{graph_conv_forward.3} parent=1 // pred_fallthru
      _
    %601 = vsyncpa [#allocation3], 1

// kernel: graph_conv_forward.2
$region0: #{graph_conv_forward.2}
  #allocation0 [shape = 'u32[]', space=smem, size = 0x4, offset = 0x4, fixed_abs, tag = 'smem constant byte address 0x4 - core index']
  #allocation1 [shape = 'u32[144,128]{1,0:T(1,128)}', space=vmem, size = 0x12000, scoped, tag = 'internal scratch']
  %s0 = inlined_call_operand.vmem [shape: f32[128,8], index: 0, kind: input, shape index: {}]
  %s1 = inlined_call_operand.vmem [shape: f32[8,256], index: 1, kind: input, shape index: {}]
  %s2 = inlined_call_operand.vmem [shape: f32[1,256], index: 2, kind: input, shape index: {}]
  %s3 = inlined_call_operand.vmem [shape: f32[2,128], index: 3, kind: input, shape index: {}]
  %s4 = inlined_call_operand.vmem [shape: f32[2,1], index: 4, kind: input, shape index: {}]
  %s5 = inlined_call_operand.vmem [shape: f32[2,128], index: 5, kind: output, shape index: {}]
  %s6 = sld [smem:[#allocation0]]
  $region30: #{graph_conv_forward.2} parent=0
    _
  %s8 = ssub.s32 1, %s6
  %s9 = scalar_select 0, %s8, %s6
  // Predicated region
  $region2: #{graph_conv_forward.2} parent=0 // pred_check
    _
  $region3: #{graph_conv_forward.2} parent=0 // pred_check_branch
    %11 = sbr.rel (0) target = $region5
  $region4: #{graph_conv_forward.2} parent=0 // pred_region
    _
  $region5: #{graph_conv_forward.2} parent=0 // pred_fallthru
    _
  // Predicated region
  $region6: #{graph_conv_forward.2} parent=0 // pred_check
    _
  $region7: #{graph_conv_forward.2} parent=0 // pred_check_branch
    %13 = sbr.rel (0) target = $region9
  $region8: #{graph_conv_forward.2} parent=0 // pred_region
    _
  $region9: #{graph_conv_forward.2} parent=0 // pred_fallthru
    _
  // Predicated region
  $region10: #{graph_conv_forward.2} parent=0 // pred_check
    _
  $region11: #{graph_conv_forward.2} parent=0 // pred_check_branch
    %15 = sbr.rel (0) target = $region13
  $region12: #{graph_conv_forward.2} parent=0 // pred_region
    _
  $region13: #{graph_conv_forward.2} parent=0 // pred_fallthru
    _
  // Predicated region
  $region14: #{graph_conv_forward.2} parent=0 // pred_check
    _
  $region15: #{graph_conv_forward.2} parent=0 // pred_check_branch
    %17 = sbr.rel (0) target = $region17
  $region16: #{graph_conv_forward.2} parent=0 // pred_region
    _
  $region17: #{graph_conv_forward.2} parent=0 // pred_fallthru
    _
  // Predicated region
  $region18: #{graph_conv_forward.2} parent=0 // pred_check
    _
  $region19: #{graph_conv_forward.2} parent=0 // pred_check_branch
    %19 = sbr.rel (0) target = $region21
  $region20: #{graph_conv_forward.2} parent=0 // pred_region
    _
  $region21: #{graph_conv_forward.2} parent=0 // pred_fallthru
    _
  %v20 = vld [vmem:[%s0] sm:$0xff]
  %v21 = vld [vmem:[%s0 + $0x8] sm:$0xff]
  %v22 = vld [vmem:[%s0 + $0x10] sm:$0xff]
  %v23 = vld [vmem:[%s0 + $0x18] sm:$0xff]
  %v24 = vld [vmem:[%s0 + $0x20] sm:$0xff]
  %v25 = vld [vmem:[%s0 + $0x28] sm:$0xff]
  %v26 = vld [vmem:[%s0 + $0x30] sm:$0xff]
  %v27 = vld [vmem:[%s0 + $0x38] sm:$0xff]
  %v28 = vld [vmem:[%s0 + $0x40] sm:$0xff]
  %v29 = vld [vmem:[%s0 + $0x48] sm:$0xff]
  %v30 = vld [vmem:[%s0 + $0x50] sm:$0xff]
  %v31 = vld [vmem:[%s0 + $0x58] sm:$0xff]
  %v32 = vld [vmem:[%s0 + $0x60] sm:$0xff]
  %v33 = vld [vmem:[%s0 + $0x68] sm:$0xff]
  %v34 = vld [vmem:[%s0 + $0x70] sm:$0xff]
  %v35 = vld [vmem:[%s0 + $0x78] sm:$0xff]
  %v36 = vld [vmem:[%s1] sm:$0xff]
  %v37 = vld [vmem:[%s1 + $0x8] sm:$0xff]
  %v38 = vld [vmem:[%s2] sm:$0x3]
  %v40 = vlaneseq
  %v41 = vshrl.u32 %v40, 7
  %v42 = vsub.s32 0, %v41
  %v43 = vrot.slane %v38, %v42
  %v44 = vlaneseq
  %v45 = vshrl.u32 %v44, 7
  %v46 = vsub.s32 1, %v45
  %v47 = vrot.slane %v38, %v46
  %vm50 = vcmask 64512
  %v52 = vsel %vm50, %v20, 0
  %v55 = vsel %vm50, %v21, 0
  %v58 = vsel %vm50, %v22, 0
  %v61 = vsel %vm50, %v23, 0
  %v64 = vsel %vm50, %v24, 0
  %v67 = vsel %vm50, %v25, 0
  %v70 = vsel %vm50, %v26, 0
  %v73 = vsel %vm50, %v27, 0
  %v76 = vsel %vm50, %v28, 0
  %v79 = vsel %vm50, %v29, 0
  %v82 = vsel %vm50, %v30, 0
  %v85 = vsel %vm50, %v31, 0
  %v88 = vsel %vm50, %v32, 0
  %v91 = vsel %vm50, %v33, 0
  %v94 = vsel %vm50, %v34, 0
  %v97 = vsel %vm50, %v35, 0
  %99 = vmatprep.subr.mxu0 %v37
  %100 = vmatpush1.msra.mxu0 %v36
  %101 = vmatprep.subr.mxu0 0.0
  %102 = vmatpush1.msra.mxu0 0.0
  %103 = vmatprep.subr.mxu0 0.0
  %104 = vmatpush1.msra.mxu0 0.0
  %105 = vmatprep.subr.mxu0 0.0
  %106 = vmatpush1.msra.mxu0 0.0
  %107 = vmatprep.subr.mxu0 0.0
  %108 = vmatpush1.msra.mxu0 0.0
  %109 = vmatprep.subr.mxu0 0.0
  %110 = vmatpush1.msra.mxu0 0.0
  %111 = vmatprep.subr.mxu0 0.0
  %112 = vmatpush1.msra.mxu0 0.0
  %113 = vmatprep.subr.mxu0 0.0
  %114 = vmatpush1.msra.mxu0 0.0
  %115 = vmatprep.subr.mxu0 0.0
  %116 = vmatpush1.msra.mxu0 0.0
  %117 = vmatprep.subr.mxu0 0.0
  %118 = vmatpush1.msra.mxu0 0.0
  %119 = vmatprep.subr.mxu0 0.0
  %120 = vmatpush1.msra.mxu0 0.0
  %121 = vmatprep.subr.mxu0 0.0
  %122 = vmatpush1.msra.mxu0 0.0
  %123 = vmatprep.subr.mxu0 0.0
  %124 = vmatpush1.msra.mxu0 0.0
  %125 = vmatprep.subr.mxu0 0.0
  %126 = vmatpush1.msra.mxu0 0.0
  %127 = vmatprep.subr.mxu0 0.0
  %128 = vmatpush1.msra.mxu0 0.0
  %129 = vmatprep.subr.mxu0 0.0
  %130 = vmatpush1.msra.mxu0 0.0
  %131 = vmatprep.subr.mxu0 0.0
  %132 = vmatpush1.msra.mxu0 0.0
  %133 = vmatprep.subr.mxu0 0.0
  %134 = vmatpush1.msra.mxu0 0.0
  %135 = vmatprep.subr.mxu0 0.0
  %136 = vmatpush1.msra.mxu0 0.0
  %137 = vmatprep.subr.mxu0 0.0
  %138 = vmatpush1.msra.mxu0 0.0
  %139 = vmatprep.subr.mxu0 0.0
  %140 = vmatpush1.msra.mxu0 0.0
  %141 = vmatprep.subr.mxu0 0.0
  %142 = vmatpush1.msra.mxu0 0.0
  %143 = vmatprep.subr.mxu0 0.0
  %144 = vmatpush1.msra.mxu0 0.0
  %145 = vmatprep.subr.mxu0 0.0
  %146 = vmatpush1.msra.mxu0 0.0
  %147 = vmatprep.subr.mxu0 0.0
  %148 = vmatpush1.msra.mxu0 0.0
  %149 = vmatprep.subr.mxu0 0.0
  %150 = vmatpush1.msra.mxu0 0.0
  %151 = vmatprep.subr.mxu0 0.0
  %152 = vmatpush1.msra.mxu0 0.0
  %153 = vmatprep.subr.mxu0 0.0
  %154 = vmatpush1.msra.mxu0 0.0
  %155 = vmatprep.subr.mxu0 0.0
  %156 = vmatpush1.msra.mxu0 0.0
  %157 = vmatprep.subr.mxu0 0.0
  %158 = vmatpush1.msra.mxu0 0.0
  %159 = vmatprep.subr.mxu0 0.0
  %160 = vmatpush1.msra.mxu0 0.0
  %161 = vmatprep.subr.mxu0 0.0
  %162 = vmatpush1.msra.mxu0 0.0
  %163 = vmatprep.mubr.f32.mxu0 0.0
  %164 = vmatmul.mubr.f32.gmra.mrb[0].mxu0 %v52
  %v165 = vpop.f32.mrb[0].mxu0
  %v166 = vadd.f32 %v43, %v165
  %v167 = vpop.f32.mrb[0].mxu0
  %v168 = vadd.f32 %v47, %v167
  %169 = vmatprep.mubr.f32.mxu0 0.0
  %170 = vmatmul.mubr.f32.gmra.mrb[0].mxu0 %v55
  %v171 = vpop.f32.mrb[0].mxu0
  %v172 = vadd.f32 %v43, %v171
  %v173 = vpop.f32.mrb[0].mxu0
  %v174 = vadd.f32 %v47, %v173
  %175 = vmatprep.mubr.f32.mxu0 0.0
  %176 = vmatmul.mubr.f32.gmra.mrb[0].mxu0 %v58
  %v177 = vpop.f32.mrb[0].mxu0
  %v178 = vadd.f32 %v43, %v177
  %v179 = vpop.f32.mrb[0].mxu0
  %v180 = vadd.f32 %v47, %v179
  %181 = vmatprep.mubr.f32.mxu0 0.0
  %182 = vmatmul.mubr.f32.gmra.mrb[0].mxu0 %v61
  %v183 = vpop.f32.mrb[0].mxu0
  %v184 = vadd.f32 %v43, %v183
  %v185 = vpop.f32.mrb[0].mxu0
  %v186 = vadd.f32 %v47, %v185
  %187 = vmatprep.mubr.f32.mxu0 0.0
  %188 = vmatmul.mubr.f32.gmra.mrb[0].mxu0 %v64
  %v189 = vpop.f32.mrb[0].mxu0
  %v190 = vadd.f32 %v43, %v189
  %v191 = vpop.f32.mrb[0].mxu0
  %v192 = vadd.f32 %v47, %v191
  %193 = vmatprep.mubr.f32.mxu0 0.0
  %194 = vmatmul.mubr.f32.gmra.mrb[0].mxu0 %v67
  %v195 = vpop.f32.mrb[0].mxu0
  %v196 = vadd.f32 %v43, %v195
  %v197 = vpop.f32.mrb[0].mxu0
  %v198 = vadd.f32 %v47, %v197
  %199 = vmatprep.mubr.f32.mxu0 0.0
  %200 = vmatmul.mubr.f32.gmra.mrb[0].mxu0 %v70
  %v201 = vpop.f32.mrb[0].mxu0
  %v202 = vadd.f32 %v43, %v201
  %v203 = vpop.f32.mrb[0].mxu0
  %v204 = vadd.f32 %v47, %v203
  %205 = vmatprep.mubr.f32.mxu0 0.0
  %206 = vmatmul.mubr.f32.gmra.mrb[0].mxu0 %v73
  %v207 = vpop.f32.mrb[0].mxu0
  %v208 = vadd.f32 %v43, %v207
  %v209 = vpop.f32.mrb[0].mxu0
  %v210 = vadd.f32 %v47, %v209
  %211 = vmatprep.mubr.f32.mxu0 0.0
  %212 = vmatmul.mubr.f32.gmra.mrb[0].mxu0 %v76
  %v213 = vpop.f32.mrb[0].mxu0
  %v214 = vadd.f32 %v43, %v213
  %v215 = vpop.f32.mrb[0].mxu0
  %v216 = vadd.f32 %v47, %v215
  %217 = vmatprep.mubr.f32.mxu0 0.0
  %218 = vmatmul.mubr.f32.gmra.mrb[0].mxu0 %v79
  %v219 = vpop.f32.mrb[0].mxu0
  %v220 = vadd.f32 %v43, %v219
  %v221 = vpop.f32.mrb[0].mxu0
  %v222 = vadd.f32 %v47, %v221
  %223 = vmatprep.mubr.f32.mxu0 0.0
  %224 = vmatmul.mubr.f32.gmra.mrb[0].mxu0 %v82
  %v225 = vpop.f32.mrb[0].mxu0
  %v226 = vadd.f32 %v43, %v225
  %v227 = vpop.f32.mrb[0].mxu0
  %v228 = vadd.f32 %v47, %v227
  %229 = vmatprep.mubr.f32.mxu0 0.0
  %230 = vmatmul.mubr.f32.gmra.mrb[0].mxu0 %v85
  %v231 = vpop.f32.mrb[0].mxu0
  %v232 = vadd.f32 %v43, %v231
  %v233 = vpop.f32.mrb[0].mxu0
  %v234 = vadd.f32 %v47, %v233
  %235 = vmatprep.mubr.f32.mxu0 0.0
  %236 = vmatmul.mubr.f32.gmra.mrb[0].mxu0 %v88
  %v237 = vpop.f32.mrb[0].mxu0
  %v238 = vadd.f32 %v43, %v237
  %v239 = vpop.f32.mrb[0].mxu0
  %v240 = vadd.f32 %v47, %v239
  %241 = vmatprep.mubr.f32.mxu0 0.0
  %242 = vmatmul.mubr.f32.gmra.mrb[0].mxu0 %v91
  %v243 = vpop.f32.mrb[0].mxu0
  %v244 = vadd.f32 %v43, %v243
  %v245 = vpop.f32.mrb[0].mxu0
  %v246 = vadd.f32 %v47, %v245
  %247 = vmatprep.mubr.f32.mxu0 0.0
  %248 = vmatmul.mubr.f32.gmra.mrb[0].mxu0 %v94
  %v249 = vpop.f32.mrb[0].mxu0
  %v250 = vadd.f32 %v43, %v249
  %v251 = vpop.f32.mrb[0].mxu0
  %v252 = vadd.f32 %v47, %v251
  %253 = vmatprep.mubr.f32.mxu0 0.0
  %254 = vmatmul.mubr.f32.gmra.mrb[0].mxu0 %v97
  %v255 = vpop.f32.mrb[0].mxu0
  %v256 = vadd.f32 %v43, %v255
  %v257 = vpop.f32.mrb[0].mxu0
  %v258 = vadd.f32 %v47, %v257
  %259 = vdwg.mxu0
  %v260 = vtanh.pop %v166
  %v261 = vtanh.pop %v168
  %v262 = vtanh.pop %v172
  %v263 = vtanh.pop %v174
  %v264 = vtanh.pop %v178
  %v265 = vtanh.pop %v180
  %v266 = vtanh.pop %v184
  %v267 = vtanh.pop %v186
  %v268 = vtanh.pop %v190
  %v269 = vtanh.pop %v192
  %v270 = vtanh.pop %v196
  %v271 = vtanh.pop %v198
  %v272 = vtanh.pop %v202
  %v273 = vtanh.pop %v204
  %v274 = vtanh.pop %v208
  %v275 = vtanh.pop %v210
  %v276 = vtanh.pop %v214
  %v277 = vtanh.pop %v216
  %v278 = vtanh.pop %v220
  %v279 = vtanh.pop %v222
  %v280 = vtanh.pop %v226
  %v281 = vtanh.pop %v228
  %v282 = vtanh.pop %v232
  %v283 = vtanh.pop %v234
  %v284 = vtanh.pop %v238
  %v285 = vtanh.pop %v240
  %v286 = vtanh.pop %v244
  %v287 = vtanh.pop %v246
  %v288 = vtanh.pop %v250
  %v289 = vtanh.pop %v252
  %v290 = vtanh.pop %v256
  %v291 = vtanh.pop %v258
  %v292 = vld [vmem:[%s3] sm:$0x3]
  %v293 = vld [vmem:[%s4] sm:$0x3]
  %v294 = vlaneseq
  %v295 = vshrl.u32 %v294, 7
  %v296 = vsub.s32 0, %v295
  %v297 = vrot.slane %v292, %v296
  %v298 = vmul.f32 %v260, %v297
  %v299 = vmul.f32 %v262, %v297
  %v300 = vmul.f32 %v264, %v297
  %v301 = vmul.f32 %v266, %v297
  %v302 = vmul.f32 %v268, %v297
  %v303 = vmul.f32 %v270, %v297
  %v304 = vmul.f32 %v272, %v297
  %v305 = vmul.f32 %v274, %v297
  %v306 = vmul.f32 %v276, %v297
  %v307 = vmul.f32 %v278, %v297
  %v308 = vmul.f32 %v280, %v297
  %v309 = vmul.f32 %v282, %v297
  %v310 = vmul.f32 %v284, %v297
  %v311 = vmul.f32 %v286, %v297
  %v312 = vmul.f32 %v288, %v297
  %v313 = vmul.f32 %v290, %v297
  %314 = vadd.xlane.f32.xlu0 %v298
  %v315 = vpop.xlane.xlu0 %314
  %316 = vadd.xlane.f32.xlu0 %v299
  %v317 = vpop.xlane.xlu0 %316
  %318 = vadd.xlane.f32.xlu0 %v300
  %v319 = vpop.xlane.xlu0 %318
  %320 = vadd.xlane.f32.xlu0 %v301
  %v321 = vpop.xlane.xlu0 %320
  %322 = vadd.xlane.f32.xlu0 %v302
  %v323 = vpop.xlane.xlu0 %322
  %324 = vadd.xlane.f32.xlu0 %v303
  %v325 = vpop.xlane.xlu0 %324
  %326 = vadd.xlane.f32.xlu0 %v304
  %v327 = vpop.xlane.xlu0 %326
  %328 = vadd.xlane.f32.xlu0 %v305
  %v329 = vpop.xlane.xlu0 %328
  %330 = vadd.xlane.f32.xlu0 %v306
  %v331 = vpop.xlane.xlu0 %330
  %332 = vadd.xlane.f32.xlu0 %v307
  %v333 = vpop.xlane.xlu0 %332
  %334 = vadd.xlane.f32.xlu0 %v308
  %v335 = vpop.xlane.xlu0 %334
  %336 = vadd.xlane.f32.xlu0 %v309
  %v337 = vpop.xlane.xlu0 %336
  %338 = vadd.xlane.f32.xlu0 %v310
  %v339 = vpop.xlane.xlu0 %338
  %340 = vadd.xlane.f32.xlu0 %v311
  %v341 = vpop.xlane.xlu0 %340
  %342 = vadd.xlane.f32.xlu0 %v312
  %v343 = vpop.xlane.xlu0 %342
  %344 = vadd.xlane.f32.xlu0 %v313
  %v345 = vpop.xlane.xlu0 %344
  %s347 = vtos %v293
  %v348 = vstv %s347
  %v350 = vadd.f32 %v315, %v348
  %v351 = vadd.f32 %v317, %v348
  %v352 = vadd.f32 %v319, %v348
  %v353 = vadd.f32 %v321, %v348
  %v354 = vadd.f32 %v323, %v348
  %v355 = vadd.f32 %v325, %v348
  %v356 = vadd.f32 %v327, %v348
  %v357 = vadd.f32 %v329, %v348
  %v358 = vadd.f32 %v331, %v348
  %v359 = vadd.f32 %v333, %v348
  %v360 = vadd.f32 %v335, %v348
  %v361 = vadd.f32 %v337, %v348
  %v362 = vadd.f32 %v339, %v348
  %v363 = vadd.f32 %v341, %v348
  %v364 = vadd.f32 %v343, %v348
  %v365 = vadd.f32 %v345, %v348
  %v382 = vlaneseq
  %v383 = vand.u32 %v382, 127
  %v384 = vlaneseq
  %v385 = vshrl.u32 %v384, 7
  %v386 = vsub.s32 %v383, %v385
  %v387 = vrot.slane %v350, %v386
  %v388 = vlaneseq
  %v389 = vshrl.u32 %v388, 7
  %v390 = vsub.s32 %v383, %v389
  %v391 = vrot.slane %v351, %v390
  %v392 = vlaneseq
  %v393 = vshrl.u32 %v392, 7
  %v394 = vsub.s32 %v383, %v393
  %v395 = vrot.slane %v352, %v394
  %v396 = vlaneseq
  %v397 = vshrl.u32 %v396, 7
  %v398 = vsub.s32 %v383, %v397
  %v399 = vrot.slane %v353, %v398
  %v400 = vlaneseq
  %v401 = vshrl.u32 %v400, 7
  %v402 = vsub.s32 %v383, %v401
  %v403 = vrot.slane %v354, %v402
  %v404 = vlaneseq
  %v405 = vshrl.u32 %v404, 7
  %v406 = vsub.s32 %v383, %v405
  %v407 = vrot.slane %v355, %v406
  %v408 = vlaneseq
  %v409 = vshrl.u32 %v408, 7
  %v410 = vsub.s32 %v383, %v409
  %v411 = vrot.slane %v356, %v410
  %v412 = vlaneseq
  %v413 = vshrl.u32 %v412, 7
  %v414 = vsub.s32 %v383, %v413
  %v415 = vrot.slane %v357, %v414
  %v416 = vlaneseq
  %v417 = vshrl.u32 %v416, 7
  %v418 = vsub.s32 %v383, %v417
  %v419 = vrot.slane %v358, %v418
  %v420 = vlaneseq
  %v421 = vshrl.u32 %v420, 7
  %v422 = vsub.s32 %v383, %v421
  %v423 = vrot.slane %v359, %v422
  %v424 = vlaneseq
  %v425 = vshrl.u32 %v424, 7
  %v426 = vsub.s32 %v383, %v425
  %v427 = vrot.slane %v360, %v426
  %v428 = vlaneseq
  %v429 = vshrl.u32 %v428, 7
  %v430 = vsub.s32 %v383, %v429
  %v431 = vrot.slane %v361, %v430
  %v432 = vlaneseq
  %v433 = vshrl.u32 %v432, 7
  %v434 = vsub.s32 %v383, %v433
  %v435 = vrot.slane %v362, %v434
  %v436 = vlaneseq
  %v437 = vshrl.u32 %v436, 7
  %v438 = vsub.s32 %v383, %v437
  %v439 = vrot.slane %v363, %v438
  %v440 = vlaneseq
  %v441 = vshrl.u32 %v440, 7
  %v442 = vsub.s32 %v383, %v441
  %v443 = vrot.slane %v364, %v442
  %v444 = vlaneseq
  %v445 = vshrl.u32 %v444, 7
  %v446 = vsub.s32 %v383, %v445
  %v447 = vrot.slane %v365, %v446
  %vm448 = vcmask 1041409
  %v449 = vsel %vm448, %v391, %v387
  %vm450 = vcmask 1042434
  %v451 = vsel %vm450, %v395, %v449
  %vm452 = vcmask 1043459
  %v453 = vsel %vm452, %v399, %v451
  %vm454 = vcmask 1044484
  %v455 = vsel %vm454, %v403, %v453
  %vm456 = vcmask 1045509
  %v457 = vsel %vm456, %v407, %v455
  %vm458 = vcmask 1046534
  %v459 = vsel %vm458, %v411, %v457
  %vm460 = vcmask 1047559
  %v461 = vsel %vm460, %v415, %v459
  %v462 = vsel %vm448, %v423, %v419
  %v463 = vsel %vm450, %v427, %v462
  %v464 = vsel %vm452, %v431, %v463
  %v465 = vsel %vm454, %v435, %v464
  %v466 = vsel %vm456, %v439, %v465
  %v467 = vsel %vm458, %v443, %v466
  %v468 = vsel %vm460, %v447, %v467
  %v471 = vsel %vm50, %v461, -inf
  %472 = vmax.xlane.f32.xlu0 %v471
  %v473 = vpop.xlane.xlu0 %472
  %v474 = vsel %vm50, %v468, -inf
  %475 = vmax.xlane.f32.xlu0 %v474
  %v476 = vpop.xlane.xlu0 %475
  %v479 = vlaneseq
  %v480 = vshrl.u32 %v479, 7
  %v481 = vsub.s32 0, %v480
  %v482 = vrot.slane %v473, %v481
  %v483 = vlaneseq
  %v484 = vshrl.u32 %v483, 7
  %v485 = vsub.s32 1, %v484
  %v486 = vrot.slane %v473, %v485
  %v487 = vlaneseq
  %v488 = vshrl.u32 %v487, 7
  %v489 = vsub.s32 2, %v488
  %v490 = vrot.slane %v473, %v489
  %v491 = vlaneseq
  %v492 = vshrl.u32 %v491, 7
  %v493 = vsub.s32 3, %v492
  %v494 = vrot.slane %v473, %v493
  %v495 = vlaneseq
  %v496 = vshrl.u32 %v495, 7
  %v497 = vsub.s32 4, %v496
  %v498 = vrot.slane %v473, %v497
  %v499 = vlaneseq
  %v500 = vshrl.u32 %v499, 7
  %v501 = vsub.s32 5, %v500
  %v502 = vrot.slane %v473, %v501
  %v503 = vlaneseq
  %v504 = vshrl.u32 %v503, 7
  %v505 = vsub.s32 6, %v504
  %v506 = vrot.slane %v473, %v505
  %v507 = vlaneseq
  %v508 = vshrl.u32 %v507, 7
  %v509 = vsub.s32 7, %v508
  %v510 = vrot.slane %v473, %v509
  %v511 = vlaneseq
  %v512 = vshrl.u32 %v511, 7
  %v513 = vsub.s32 0, %v512
  %v514 = vrot.slane %v476, %v513
  %v515 = vlaneseq
  %v516 = vshrl.u32 %v515, 7
  %v517 = vsub.s32 1, %v516
  %v518 = vrot.slane %v476, %v517
  %v519 = vlaneseq
  %v520 = vshrl.u32 %v519, 7
  %v521 = vsub.s32 2, %v520
  %v522 = vrot.slane %v476, %v521
  %v523 = vlaneseq
  %v524 = vshrl.u32 %v523, 7
  %v525 = vsub.s32 3, %v524
  %v526 = vrot.slane %v476, %v525
  %v527 = vlaneseq
  %v528 = vshrl.u32 %v527, 7
  %v529 = vsub.s32 4, %v528
  %v530 = vrot.slane %v476, %v529
  %v531 = vlaneseq
  %v532 = vshrl.u32 %v531, 7
  %v533 = vsub.s32 5, %v532
  %v534 = vrot.slane %v476, %v533
  %v535 = vlaneseq
  %v536 = vshrl.u32 %v535, 7
  %v537 = vsub.s32 6, %v536
  %v538 = vrot.slane %v476, %v537
  %v539 = vlaneseq
  %v540 = vshrl.u32 %v539, 7
  %v541 = vsub.s32 7, %v540
  %v542 = vrot.slane %v476, %v541
  %v559 = vsub.f32 %v350, %v482
  %v560 = vsub.f32 %v351, %v486
  %v561 = vsub.f32 %v352, %v490
  %v562 = vsub.f32 %v353, %v494
  %v563 = vsub.f32 %v354, %v498
  %v564 = vsub.f32 %v355, %v502
  %v565 = vsub.f32 %v356, %v506
  %v566 = vsub.f32 %v357, %v510
  %v567 = vsub.f32 %v358, %v514
  %v568 = vsub.f32 %v359, %v518
  %v569 = vsub.f32 %v360, %v522
  %v570 = vsub.f32 %v361, %v526
  %v571 = vsub.f32 %v362, %v530
  %v572 = vsub.f32 %v363, %v534
  %v573 = vsub.f32 %v364, %v538
  %v574 = vsub.f32 %v365, %v542
  %v575 = vmul.f32 %v559, 1.442695
  %v576 = vpow.pop %v575
  %v577 = vmul.f32 %v560, 1.442695
  %v578 = vpow.pop %v577
  %v579 = vmul.f32 %v561, 1.442695
  %v580 = vpow.pop %v579
  %v581 = vmul.f32 %v562, 1.442695
  %v582 = vpow.pop %v581
  %v583 = vmul.f32 %v563, 1.442695
  %v584 = vpow.pop %v583
  %v585 = vmul.f32 %v564, 1.442695
  %v586 = vpow.pop %v585
  %v587 = vmul.f32 %v565, 1.442695
  %v588 = vpow.pop %v587
  %v589 = vmul.f32 %v566, 1.442695
  %v590 = vpow.pop %v589
  %v591 = vmul.f32 %v567, 1.442695
  %v592 = vpow.pop %v591
  %v593 = vmul.f32 %v568, 1.442695
  %v594 = vpow.pop %v593
  %v595 = vmul.f32 %v569, 1.442695
  %v596 = vpow.pop %v595
  %v597 = vmul.f32 %v570, 1.442695
  %v598 = vpow.pop %v597
  %v599 = vmul.f32 %v571, 1.442695
  %v600 = vpow.pop %v599
  %v601 = vmul.f32 %v572, 1.442695
  %v602 = vpow.pop %v601
  %v603 = vmul.f32 %v573, 1.442695
  %v604 = vpow.pop %v603
  %v605 = vmul.f32 %v574, 1.442695
  %v606 = vpow.pop %v605
  %623 = vset.pattern.permute.xlu0 0
  %624 = vperm.xlu0 %623, %v576
  %v625 = vpop.permute.xlu0 %624
  %626 = vset.pattern.permute.xlu0 0
  %627 = vperm.xlu0 %626, %v578
  %v628 = vpop.permute.xlu0 %627
  %629 = vset.pattern.permute.xlu0 0
  %630 = vperm.xlu0 %629, %v580
  %v631 = vpop.permute.xlu0 %630
  %632 = vset.pattern.permute.xlu0 0
  %633 = vperm.xlu0 %632, %v582
  %v634 = vpop.permute.xlu0 %633
  %635 = vset.pattern.permute.xlu0 0
  %636 = vperm.xlu0 %635, %v584
  %v637 = vpop.permute.xlu0 %636
  %638 = vset.pattern.permute.xlu0 0
  %639 = vperm.xlu0 %638, %v586
  %v640 = vpop.permute.xlu0 %639
  %641 = vset.pattern.permute.xlu0 0
  %642 = vperm.xlu0 %641, %v588
  %v643 = vpop.permute.xlu0 %642
  %644 = vset.pattern.permute.xlu0 0
  %645 = vperm.xlu0 %644, %v590
  %v646 = vpop.permute.xlu0 %645
  %647 = vset.pattern.permute.xlu0 0
  %648 = vperm.xlu0 %647, %v592
  %v649 = vpop.permute.xlu0 %648
  %650 = vset.pattern.permute.xlu0 0
  %651 = vperm.xlu0 %650, %v594
  %v652 = vpop.permute.xlu0 %651
  %653 = vset.pattern.permute.xlu0 0
  %654 = vperm.xlu0 %653, %v596
  %v655 = vpop.permute.xlu0 %654
  %656 = vset.pattern.permute.xlu0 0
  %657 = vperm.xlu0 %656, %v598
  %v658 = vpop.permute.xlu0 %657
  %659 = vset.pattern.permute.xlu0 0
  %660 = vperm.xlu0 %659, %v600
  %v661 = vpop.permute.xlu0 %660
  %662 = vset.pattern.permute.xlu0 0
  %663 = vperm.xlu0 %662, %v602
  %v664 = vpop.permute.xlu0 %663
  %665 = vset.pattern.permute.xlu0 0
  %666 = vperm.xlu0 %665, %v604
  %v667 = vpop.permute.xlu0 %666
  %668 = vset.pattern.permute.xlu0 0
  %669 = vperm.xlu0 %668, %v606
  %v670 = vpop.permute.xlu0 %669
  %v671 = vlaneseq
  %v672 = vshrl.u32 %v671, 7
  %v673 = vsub.s32 %v383, %v672
  %v674 = vrot.slane %v625, %v673
  %v675 = vlaneseq
  %v676 = vshrl.u32 %v675, 7
  %v677 = vsub.s32 %v383, %v676
  %v678 = vrot.slane %v628, %v677
  %v679 = vlaneseq
  %v680 = vshrl.u32 %v679, 7
  %v681 = vsub.s32 %v383, %v680
  %v682 = vrot.slane %v631, %v681
  %v683 = vlaneseq
  %v684 = vshrl.u32 %v683, 7
  %v685 = vsub.s32 %v383, %v684
  %v686 = vrot.slane %v634, %v685
  %v687 = vlaneseq
  %v688 = vshrl.u32 %v687, 7
  %v689 = vsub.s32 %v383, %v688
  %v690 = vrot.slane %v637, %v689
  %v691 = vlaneseq
  %v692 = vshrl.u32 %v691, 7
  %v693 = vsub.s32 %v383, %v692
  %v694 = vrot.slane %v640, %v693
  %v695 = vlaneseq
  %v696 = vshrl.u32 %v695, 7
  %v697 = vsub.s32 %v383, %v696
  %v698 = vrot.slane %v643, %v697
  %v699 = vlaneseq
  %v700 = vshrl.u32 %v699, 7
  %v701 = vsub.s32 %v383, %v700
  %v702 = vrot.slane %v646, %v701
  %v703 = vlaneseq
  %v704 = vshrl.u32 %v703, 7
  %v705 = vsub.s32 %v383, %v704
  %v706 = vrot.slane %v649, %v705
  %v707 = vlaneseq
  %v708 = vshrl.u32 %v707, 7
  %v709 = vsub.s32 %v383, %v708
  %v710 = vrot.slane %v652, %v709
  %v711 = vlaneseq
  %v712 = vshrl.u32 %v711, 7
  %v713 = vsub.s32 %v383, %v712
  %v714 = vrot.slane %v655, %v713
  %v715 = vlaneseq
  %v716 = vshrl.u32 %v715, 7
  %v717 = vsub.s32 %v383, %v716
  %v718 = vrot.slane %v658, %v717
  %v719 = vlaneseq
  %v720 = vshrl.u32 %v719, 7
  %v721 = vsub.s32 %v383, %v720
  %v722 = vrot.slane %v661, %v721
  %v723 = vlaneseq
  %v724 = vshrl.u32 %v723, 7
  %v725 = vsub.s32 %v383, %v724
  %v726 = vrot.slane %v664, %v725
  %v727 = vlaneseq
  %v728 = vshrl.u32 %v727, 7
  %v729 = vsub.s32 %v383, %v728
  %v730 = vrot.slane %v667, %v729
  %v731 = vlaneseq
  %v732 = vshrl.u32 %v731, 7
  %v733 = vsub.s32 %v383, %v732
  %v734 = vrot.slane %v670, %v733
  %v735 = vsel %vm448, %v678, %v674
  %v736 = vsel %vm450, %v682, %v735
  %v737 = vsel %vm452, %v686, %v736
  %v738 = vsel %vm454, %v690, %v737
  %v739 = vsel %vm456, %v694, %v738
  %v740 = vsel %vm458, %v698, %v739
  %v741 = vsel %vm460, %v702, %v740
  %v742 = vsel %vm448, %v710, %v706
  %v743 = vsel %vm450, %v714, %v742
  %v744 = vsel %vm452, %v718, %v743
  %v745 = vsel %vm454, %v722, %v744
  %v746 = vsel %vm456, %v726, %v745
  %v747 = vsel %vm458, %v730, %v746
  %v748 = vsel %vm460, %v734, %v747
  %v751 = vsel %vm50, %v741, 0.0
  %752 = vadd.xlane.f32.xlu0 %v751
  %v753 = vpop.xlane.xlu0 %752
  %v754 = vsel %vm50, %v748, 0.0
  %755 = vadd.xlane.f32.xlu0 %v754
  %v756 = vpop.xlane.xlu0 %755
  %v759 = vlaneseq
  %v760 = vshrl.u32 %v759, 7
  %v761 = vsub.s32 0, %v760
  %v762 = vrot.slane %v753, %v761
  %v763 = vlaneseq
  %v764 = vshrl.u32 %v763, 7
  %v765 = vsub.s32 1, %v764
  %v766 = vrot.slane %v753, %v765
  %v767 = vlaneseq
  %v768 = vshrl.u32 %v767, 7
  %v769 = vsub.s32 2, %v768
  %v770 = vrot.slane %v753, %v769
  %v771 = vlaneseq
  %v772 = vshrl.u32 %v771, 7
  %v773 = vsub.s32 3, %v772
  %v774 = vrot.slane %v753, %v773
  %v775 = vlaneseq
  %v776 = vshrl.u32 %v775, 7
  %v777 = vsub.s32 4, %v776
  %v778 = vrot.slane %v753, %v777
  %v779 = vlaneseq
  %v780 = vshrl.u32 %v779, 7
  %v781 = vsub.s32 5, %v780
  %v782 = vrot.slane %v753, %v781
  %v783 = vlaneseq
  %v784 = vshrl.u32 %v783, 7
  %v785 = vsub.s32 6, %v784
  %v786 = vrot.slane %v753, %v785
  %v787 = vlaneseq
  %v788 = vshrl.u32 %v787, 7
  %v789 = vsub.s32 7, %v788
  %v790 = vrot.slane %v753, %v789
  %v791 = vlaneseq
  %v792 = vshrl.u32 %v791, 7
  %v793 = vsub.s32 0, %v792
  %v794 = vrot.slane %v756, %v793
  %v795 = vlaneseq
  %v796 = vshrl.u32 %v795, 7
  %v797 = vsub.s32 1, %v796
  %v798 = vrot.slane %v756, %v797
  %v799 = vlaneseq
  %v800 = vshrl.u32 %v799, 7
  %v801 = vsub.s32 2, %v800
  %v802 = vrot.slane %v756, %v801
  %v803 = vlaneseq
  %v804 = vshrl.u32 %v803, 7
  %v805 = vsub.s32 3, %v804
  %v806 = vrot.slane %v756, %v805
  %v807 = vlaneseq
  %v808 = vshrl.u32 %v807, 7
  %v809 = vsub.s32 4, %v808
  %v810 = vrot.slane %v756, %v809
  %v811 = vlaneseq
  %v812 = vshrl.u32 %v811, 7
  %v813 = vsub.s32 5, %v812
  %v814 = vrot.slane %v756, %v813
  %v815 = vlaneseq
  %v816 = vshrl.u32 %v815, 7
  %v817 = vsub.s32 6, %v816
  %v818 = vrot.slane %v756, %v817
  %v819 = vlaneseq
  %v820 = vshrl.u32 %v819, 7
  %v821 = vsub.s32 7, %v820
  %v822 = vrot.slane %v756, %v821
  %v839 = vrcp.pop %v762
  %v840 = vmul.f32 %v576, %v839
  %v841 = vrcp.pop %v766
  %v842 = vmul.f32 %v578, %v841
  %v843 = vrcp.pop %v770
  %v844 = vmul.f32 %v580, %v843
  %v845 = vrcp.pop %v774
  %v846 = vmul.f32 %v582, %v845
  %v847 = vrcp.pop %v778
  %v848 = vmul.f32 %v584, %v847
  %v849 = vrcp.pop %v782
  %v850 = vmul.f32 %v586, %v849
  %v851 = vrcp.pop %v786
  %v852 = vmul.f32 %v588, %v851
  %v853 = vrcp.pop %v790
  %v854 = vmul.f32 %v590, %v853
  %v855 = vrcp.pop %v794
  %v856 = vmul.f32 %v592, %v855
  %v857 = vrcp.pop %v798
  %v858 = vmul.f32 %v594, %v857
  %v859 = vrcp.pop %v802
  %v860 = vmul.f32 %v596, %v859
  %v861 = vrcp.pop %v806
  %v862 = vmul.f32 %v598, %v861
  %v863 = vrcp.pop %v810
  %v864 = vmul.f32 %v600, %v863
  %v865 = vrcp.pop %v814
  %v866 = vmul.f32 %v602, %v865
  %v867 = vrcp.pop %v818
  %v868 = vmul.f32 %v604, %v867
  %v869 = vrcp.pop %v822
  %v870 = vmul.f32 %v606, %v869
  %v871 = vlaneseq
  %v872 = vshrl.u32 %v871, 7
  %v873 = vsub.s32 1, %v872
  %v874 = vrot.slane %v292, %v873
  %v875 = vmul.f32 %v261, %v874
  %v876 = vmul.f32 %v263, %v874
  %v877 = vmul.f32 %v265, %v874
  %v878 = vmul.f32 %v267, %v874
  %v879 = vmul.f32 %v269, %v874
  %v880 = vmul.f32 %v271, %v874
  %v881 = vmul.f32 %v273, %v874
  %v882 = vmul.f32 %v275, %v874
  %v883 = vmul.f32 %v277, %v874
  %v884 = vmul.f32 %v279, %v874
  %v885 = vmul.f32 %v281, %v874
  %v886 = vmul.f32 %v283, %v874
  %v887 = vmul.f32 %v285, %v874
  %v888 = vmul.f32 %v287, %v874
  %v889 = vmul.f32 %v289, %v874
  %v890 = vmul.f32 %v291, %v874
  %891 = vadd.xlane.f32.xlu0 %v875
  %v892 = vpop.xlane.xlu0 %891
  %893 = vadd.xlane.f32.xlu0 %v876
  %v894 = vpop.xlane.xlu0 %893
  %895 = vadd.xlane.f32.xlu0 %v877
  %v896 = vpop.xlane.xlu0 %895
  %897 = vadd.xlane.f32.xlu0 %v878
  %v898 = vpop.xlane.xlu0 %897
  %899 = vadd.xlane.f32.xlu0 %v879
  %v900 = vpop.xlane.xlu0 %899
  %901 = vadd.xlane.f32.xlu0 %v880
  %v902 = vpop.xlane.xlu0 %901
  %903 = vadd.xlane.f32.xlu0 %v881
  %v904 = vpop.xlane.xlu0 %903
  %905 = vadd.xlane.f32.xlu0 %v882
  %v906 = vpop.xlane.xlu0 %905
  %907 = vadd.xlane.f32.xlu0 %v883
  %v908 = vpop.xlane.xlu0 %907
  %909 = vadd.xlane.f32.xlu0 %v884
  %v910 = vpop.xlane.xlu0 %909
  %911 = vadd.xlane.f32.xlu0 %v885
  %v912 = vpop.xlane.xlu0 %911
  %913 = vadd.xlane.f32.xlu0 %v886
  %v914 = vpop.xlane.xlu0 %913
  %915 = vadd.xlane.f32.xlu0 %v887
  %v916 = vpop.xlane.xlu0 %915
  %917 = vadd.xlane.f32.xlu0 %v888
  %v918 = vpop.xlane.xlu0 %917
  %919 = vadd.xlane.f32.xlu0 %v889
  %v920 = vpop.xlane.xlu0 %919
  %921 = vadd.xlane.f32.xlu0 %v890
  %v922 = vpop.xlane.xlu0 %921
  %v923 = vrot.slane %v293, 1
  %s924 = vtos %v923
  %v925 = vstv %s924
  %v927 = vadd.f32 %v892, %v925
  %v928 = vadd.f32 %v894, %v925
  %v929 = vadd.f32 %v896, %v925
  %v930 = vadd.f32 %v898, %v925
  %v931 = vadd.f32 %v900, %v925
  %v932 = vadd.f32 %v902, %v925
  %v933 = vadd.f32 %v904, %v925
  %v934 = vadd.f32 %v906, %v925
  %v935 = vadd.f32 %v908, %v925
  %v936 = vadd.f32 %v910, %v925
  %v937 = vadd.f32 %v912, %v925
  %v938 = vadd.f32 %v914, %v925
  %v939 = vadd.f32 %v916, %v925
  %v940 = vadd.f32 %v918, %v925
  %v941 = vadd.f32 %v920, %v925
  %v942 = vadd.f32 %v922, %v925
  %v959 = vlaneseq
  %v960 = vshrl.u32 %v959, 7
  %v961 = vsub.s32 %v383, %v960
  %v962 = vrot.slane %v927, %v961
  %v963 = vlaneseq
  %v964 = vshrl.u32 %v963, 7
  %v965 = vsub.s32 %v383, %v964
  %v966 = vrot.slane %v928, %v965
  %v967 = vlaneseq
  %v968 = vshrl.u32 %v967, 7
  %v969 = vsub.s32 %v383, %v968
  %v970 = vrot.slane %v929, %v969
  %v971 = vlaneseq
  %v972 = vshrl.u32 %v971, 7
  %v973 = vsub.s32 %v383, %v972
  %v974 = vrot.slane %v930, %v973
  %v975 = vlaneseq
  %v976 = vshrl.u32 %v975, 7
  %v977 = vsub.s32 %v383, %v976
  %v978 = vrot.slane %v931, %v977
  %v979 = vlaneseq
  %v980 = vshrl.u32 %v979, 7
  %v981 = vsub.s32 %v383, %v980
  %v982 = vrot.slane %v932, %v981
  %v983 = vlaneseq
  %v984 = vshrl.u32 %v983, 7
  %v985 = vsub.s32 %v383, %v984
  %v986 = vrot.slane %v933, %v985
  %v987 = vlaneseq
  %v988 = vshrl.u32 %v987, 7
  %v989 = vsub.s32 %v383, %v988
  %v990 = vrot.slane %v934, %v989
  %v991 = vlaneseq
  %v992 = vshrl.u32 %v991, 7
  %v993 = vsub.s32 %v383, %v992
  %v994 = vrot.slane %v935, %v993
  %v995 = vlaneseq
  %v996 = vshrl.u32 %v995, 7
  %v997 = vsub.s32 %v383, %v996
  %v998 = vrot.slane %v936, %v997
  %v999 = vlaneseq
  %v1000 = vshrl.u32 %v999, 7
  %v1001 = vsub.s32 %v383, %v1000
  %v1002 = vrot.slane %v937, %v1001
  %v1003 = vlaneseq
  %v1004 = vshrl.u32 %v1003, 7
  %v1005 = vsub.s32 %v383, %v1004
  %v1006 = vrot.slane %v938, %v1005
  %v1007 = vlaneseq
  %v1008 = vshrl.u32 %v1007, 7
  %v1009 = vsub.s32 %v383, %v1008
  %v1010 = vrot.slane %v939, %v1009
  %v1011 = vlaneseq
  %v1012 = vshrl.u32 %v1011, 7
  %v1013 = vsub.s32 %v383, %v1012
  %v1014 = vrot.slane %v940, %v1013
  %v1015 = vlaneseq
  %v1016 = vshrl.u32 %v1015, 7
  %v1017 = vsub.s32 %v383, %v1016
  %v1018 = vrot.slane %v941, %v1017
  %v1019 = vlaneseq
  %v1020 = vshrl.u32 %v1019, 7
  %v1021 = vsub.s32 %v383, %v1020
  %v1022 = vrot.slane %v942, %v1021
  %v1023 = vsel %vm448, %v966, %v962
  %v1024 = vsel %vm450, %v970, %v1023
  %v1025 = vsel %vm452, %v974, %v1024
  %v1026 = vsel %vm454, %v978, %v1025
  %v1027 = vsel %vm456, %v982, %v1026
  %v1028 = vsel %vm458, %v986, %v1027
  %v1029 = vsel %vm460, %v990, %v1028
  %v1030 = vsel %vm448, %v998, %v994
  %v1031 = vsel %vm450, %v1002, %v1030
  %v1032 = vsel %vm452, %v1006, %v1031
  %v1033 = vsel %vm454, %v1010, %v1032
  %v1034 = vsel %vm456, %v1014, %v1033
  %v1035 = vsel %vm458, %v1018, %v1034
  %v1036 = vsel %vm460, %v1022, %v1035
  %v1039 = vsel %vm50, %v1029, -inf
  %1040 = vmax.xlane.f32.xlu0 %v1039
  %v1041 = vpop.xlane.xlu0 %1040
  %v1042 = vsel %vm50, %v1036, -inf
  %1043 = vmax.xlane.f32.xlu0 %v1042
  %v1044 = vpop.xlane.xlu0 %1043
  %v1047 = vlaneseq
  %v1048 = vshrl.u32 %v1047, 7
  %v1049 = vsub.s32 0, %v1048
  %v1050 = vrot.slane %v1041, %v1049
  %v1051 = vlaneseq
  %v1052 = vshrl.u32 %v1051, 7
  %v1053 = vsub.s32 1, %v1052
  %v1054 = vrot.slane %v1041, %v1053
  %v1055 = vlaneseq
  %v1056 = vshrl.u32 %v1055, 7
  %v1057 = vsub.s32 2, %v1056
  %v1058 = vrot.slane %v1041, %v1057
  %v1059 = vlaneseq
  %v1060 = vshrl.u32 %v1059, 7
  %v1061 = vsub.s32 3, %v1060
  %v1062 = vrot.slane %v1041, %v1061
  %v1063 = vlaneseq
  %v1064 = vshrl.u32 %v1063, 7
  %v1065 = vsub.s32 4, %v1064
  %v1066 = vrot.slane %v1041, %v1065
  %v1067 = vlaneseq
  %v1068 = vshrl.u32 %v1067, 7
  %v1069 = vsub.s32 5, %v1068
  %v1070 = vrot.slane %v1041, %v1069
  %v1071 = vlaneseq
  %v1072 = vshrl.u32 %v1071, 7
  %v1073 = vsub.s32 6, %v1072
  %v1074 = vrot.slane %v1041, %v1073
  %v1075 = vlaneseq
  %v1076 = vshrl.u32 %v1075, 7
  %v1077 = vsub.s32 7, %v1076
  %v1078 = vrot.slane %v1041, %v1077
  %v1079 = vlaneseq
  %v1080 = vshrl.u32 %v1079, 7
  %v1081 = vsub.s32 0, %v1080
  %v1082 = vrot.slane %v1044, %v1081
  %v1083 = vlaneseq
  %v1084 = vshrl.u32 %v1083, 7
  %v1085 = vsub.s32 1, %v1084
  %v1086 = vrot.slane %v1044, %v1085
  %v1087 = vlaneseq
  %v1088 = vshrl.u32 %v1087, 7
  %v1089 = vsub.s32 2, %v1088
  %v1090 = vrot.slane %v1044, %v1089
  %v1091 = vlaneseq
  %v1092 = vshrl.u32 %v1091, 7
  %v1093 = vsub.s32 3, %v1092
  %v1094 = vrot.slane %v1044, %v1093
  %v1095 = vlaneseq
  %v1096 = vshrl.u32 %v1095, 7
  %v1097 = vsub.s32 4, %v1096
  %v1098 = vrot.slane %v1044, %v1097
  %v1099 = vlaneseq
  %v1100 = vshrl.u32 %v1099, 7
  %v1101 = vsub.s32 5, %v1100
  %v1102 = vrot.slane %v1044, %v1101
  %v1103 = vlaneseq
  %v1104 = vshrl.u32 %v1103, 7
  %v1105 = vsub.s32 6, %v1104
  %v1106 = vrot.slane %v1044, %v1105
  %v1107 = vlaneseq
  %v1108 = vshrl.u32 %v1107, 7
  %v1109 = vsub.s32 7, %v1108
  %v1110 = vrot.slane %v1044, %v1109
  %v1127 = vsub.f32 %v927, %v1050
  %v1128 = vsub.f32 %v928, %v1054
  %v1129 = vsub.f32 %v929, %v1058
  %v1130 = vsub.f32 %v930, %v1062
  %v1131 = vsub.f32 %v931, %v1066
  %v1132 = vsub.f32 %v932, %v1070
  %v1133 = vsub.f32 %v933, %v1074
  %v1134 = vsub.f32 %v934, %v1078
  %v1135 = vsub.f32 %v935, %v1082
  %v1136 = vsub.f32 %v936, %v1086
  %v1137 = vsub.f32 %v937, %v1090
  %v1138 = vsub.f32 %v938, %v1094
  %v1139 = vsub.f32 %v939, %v1098
  %v1140 = vsub.f32 %v940, %v1102
  %v1141 = vsub.f32 %v941, %v1106
  %v1142 = vsub.f32 %v942, %v1110
  %v1143 = vmul.f32 %v1127, 1.442695
  %v1144 = vpow.pop %v1143
  %v1145 = vmul.f32 %v1128, 1.442695
  %v1146 = vpow.pop %v1145
  %v1147 = vmul.f32 %v1129, 1.442695
  %v1148 = vpow.pop %v1147
  %v1149 = vmul.f32 %v1130, 1.442695
  %v1150 = vpow.pop %v1149
  %v1151 = vmul.f32 %v1131, 1.442695
  %v1152 = vpow.pop %v1151
  %v1153 = vmul.f32 %v1132, 1.442695
  %v1154 = vpow.pop %v1153
  %v1155 = vmul.f32 %v1133, 1.442695
  %v1156 = vpow.pop %v1155
  %v1157 = vmul.f32 %v1134, 1.442695
  %v1158 = vpow.pop %v1157
  %v1159 = vmul.f32 %v1135, 1.442695
  %v1160 = vpow.pop %v1159
  %v1161 = vmul.f32 %v1136, 1.442695
  %v1162 = vpow.pop %v1161
  %v1163 = vmul.f32 %v1137, 1.442695
  %v1164 = vpow.pop %v1163
  %v1165 = vmul.f32 %v1138, 1.442695
  %v1166 = vpow.pop %v1165
  %v1167 = vmul.f32 %v1139, 1.442695
  %v1168 = vpow.pop %v1167
  %v1169 = vmul.f32 %v1140, 1.442695
  %v1170 = vpow.pop %v1169
  %v1171 = vmul.f32 %v1141, 1.442695
  %v1172 = vpow.pop %v1171
  %v1173 = vmul.f32 %v1142, 1.442695
  %v1174 = vpow.pop %v1173
  %1191 = vset.pattern.permute.xlu0 0
  %1192 = vperm.xlu0 %1191, %v1144
  %v1193 = vpop.permute.xlu0 %1192
  %1194 = vset.pattern.permute.xlu0 0
  %1195 = vperm.xlu0 %1194, %v1146
  %v1196 = vpop.permute.xlu0 %1195
  %1197 = vset.pattern.permute.xlu0 0
  %1198 = vperm.xlu0 %1197, %v1148
  %v1199 = vpop.permute.xlu0 %1198
  %1200 = vset.pattern.permute.xlu0 0
  %1201 = vperm.xlu0 %1200, %v1150
  %v1202 = vpop.permute.xlu0 %1201
  %1203 = vset.pattern.permute.xlu0 0
  %1204 = vperm.xlu0 %1203, %v1152
  %v1205 = vpop.permute.xlu0 %1204
  %1206 = vset.pattern.permute.xlu0 0
  %1207 = vperm.xlu0 %1206, %v1154
  %v1208 = vpop.permute.xlu0 %1207
  %1209 = vset.pattern.permute.xlu0 0
  %1210 = vperm.xlu0 %1209, %v1156
  %v1211 = vpop.permute.xlu0 %1210
  %1212 = vset.pattern.permute.xlu0 0
  %1213 = vperm.xlu0 %1212, %v1158
  %v1214 = vpop.permute.xlu0 %1213
  %1215 = vset.pattern.permute.xlu0 0
  %1216 = vperm.xlu0 %1215, %v1160
  %v1217 = vpop.permute.xlu0 %1216
  %1218 = vset.pattern.permute.xlu0 0
  %1219 = vperm.xlu0 %1218, %v1162
  %v1220 = vpop.permute.xlu0 %1219
  %1221 = vset.pattern.permute.xlu0 0
  %1222 = vperm.xlu0 %1221, %v1164
  %v1223 = vpop.permute.xlu0 %1222
  %1224 = vset.pattern.permute.xlu0 0
  %1225 = vperm.xlu0 %1224, %v1166
  %v1226 = vpop.permute.xlu0 %1225
  %1227 = vset.pattern.permute.xlu0 0
  %1228 = vperm.xlu0 %1227, %v1168
  %v1229 = vpop.permute.xlu0 %1228
  %1230 = vset.pattern.permute.xlu0 0
  %1231 = vperm.xlu0 %1230, %v1170
  %v1232 = vpop.permute.xlu0 %1231
  %1233 = vset.pattern.permute.xlu0 0
  %1234 = vperm.xlu0 %1233, %v1172
  %v1235 = vpop.permute.xlu0 %1234
  %1236 = vset.pattern.permute.xlu0 0
  %1237 = vperm.xlu0 %1236, %v1174
  %v1238 = vpop.permute.xlu0 %1237
  %v1239 = vlaneseq
  %v1240 = vshrl.u32 %v1239, 7
  %v1241 = vsub.s32 %v383, %v1240
  %v1242 = vrot.slane %v1193, %v1241
  %v1243 = vlaneseq
  %v1244 = vshrl.u32 %v1243, 7
  %v1245 = vsub.s32 %v383, %v1244
  %v1246 = vrot.slane %v1196, %v1245
  %v1247 = vlaneseq
  %v1248 = vshrl.u32 %v1247, 7
  %v1249 = vsub.s32 %v383, %v1248
  %v1250 = vrot.slane %v1199, %v1249
  %v1251 = vlaneseq
  %v1252 = vshrl.u32 %v1251, 7
  %v1253 = vsub.s32 %v383, %v1252
  %v1254 = vrot.slane %v1202, %v1253
  %v1255 = vlaneseq
  %v1256 = vshrl.u32 %v1255, 7
  %v1257 = vsub.s32 %v383, %v1256
  %v1258 = vrot.slane %v1205, %v1257
  %v1259 = vlaneseq
  %v1260 = vshrl.u32 %v1259, 7
  %v1261 = vsub.s32 %v383, %v1260
  %v1262 = vrot.slane %v1208, %v1261
  %v1263 = vlaneseq
  %v1264 = vshrl.u32 %v1263, 7
  %v1265 = vsub.s32 %v383, %v1264
  %v1266 = vrot.slane %v1211, %v1265
  %v1267 = vlaneseq
  %v1268 = vshrl.u32 %v1267, 7
  %v1269 = vsub.s32 %v383, %v1268
  %v1270 = vrot.slane %v1214, %v1269
  %v1271 = vlaneseq
  %v1272 = vshrl.u32 %v1271, 7
  %v1273 = vsub.s32 %v383, %v1272
  %v1274 = vrot.slane %v1217, %v1273
  %v1275 = vlaneseq
  %v1276 = vshrl.u32 %v1275, 7
  %v1277 = vsub.s32 %v383, %v1276
  %v1278 = vrot.slane %v1220, %v1277
  %v1279 = vlaneseq
  %v1280 = vshrl.u32 %v1279, 7
  %v1281 = vsub.s32 %v383, %v1280
  %v1282 = vrot.slane %v1223, %v1281
  %v1283 = vlaneseq
  %v1284 = vshrl.u32 %v1283, 7
  %v1285 = vsub.s32 %v383, %v1284
  %v1286 = vrot.slane %v1226, %v1285
  %v1287 = vlaneseq
  %v1288 = vshrl.u32 %v1287, 7
  %v1289 = vsub.s32 %v383, %v1288
  %v1290 = vrot.slane %v1229, %v1289
  %v1291 = vlaneseq
  %v1292 = vshrl.u32 %v1291, 7
  %v1293 = vsub.s32 %v383, %v1292
  %v1294 = vrot.slane %v1232, %v1293
  %v1295 = vlaneseq
  %v1296 = vshrl.u32 %v1295, 7
  %v1297 = vsub.s32 %v383, %v1296
  %v1298 = vrot.slane %v1235, %v1297
  %v1299 = vlaneseq
  %v1300 = vshrl.u32 %v1299, 7
  %v1301 = vsub.s32 %v383, %v1300
  %v1302 = vrot.slane %v1238, %v1301
  %v1303 = vsel %vm448, %v1246, %v1242
  %v1304 = vsel %vm450, %v1250, %v1303
  %v1305 = vsel %vm452, %v1254, %v1304
  %v1306 = vsel %vm454, %v1258, %v1305
  %v1307 = vsel %vm456, %v1262, %v1306
  %v1308 = vsel %vm458, %v1266, %v1307
  %v1309 = vsel %vm460, %v1270, %v1308
  %v1310 = vsel %vm448, %v1278, %v1274
  %v1311 = vsel %vm450, %v1282, %v1310
  %v1312 = vsel %vm452, %v1286, %v1311
  %v1313 = vsel %vm454, %v1290, %v1312
  %v1314 = vsel %vm456, %v1294, %v1313
  %v1315 = vsel %vm458, %v1298, %v1314
  %v1316 = vsel %vm460, %v1302, %v1315
  %v1319 = vsel %vm50, %v1309, 0.0
  %1320 = vadd.xlane.f32.xlu0 %v1319
  %v1321 = vpop.xlane.xlu0 %1320
  %v1322 = vsel %vm50, %v1316, 0.0
  %1323 = vadd.xlane.f32.xlu0 %v1322
  %v1324 = vpop.xlane.xlu0 %1323
  %v1327 = vlaneseq
  %v1328 = vshrl.u32 %v1327, 7
  %v1329 = vsub.s32 0, %v1328
  %v1330 = vrot.slane %v1321, %v1329
  %v1331 = vlaneseq
  %v1332 = vshrl.u32 %v1331, 7
  %v1333 = vsub.s32 1, %v1332
  %v1334 = vrot.slane %v1321, %v1333
  %v1335 = vlaneseq
  %v1336 = vshrl.u32 %v1335, 7
  %v1337 = vsub.s32 2, %v1336
  %v1338 = vrot.slane %v1321, %v1337
  %v1339 = vlaneseq
  %v1340 = vshrl.u32 %v1339, 7
  %v1341 = vsub.s32 3, %v1340
  %v1342 = vrot.slane %v1321, %v1341
  %v1343 = vlaneseq
  %v1344 = vshrl.u32 %v1343, 7
  %v1345 = vsub.s32 4, %v1344
  %v1346 = vrot.slane %v1321, %v1345
  %v1347 = vlaneseq
  %v1348 = vshrl.u32 %v1347, 7
  %v1349 = vsub.s32 5, %v1348
  %v1350 = vrot.slane %v1321, %v1349
  %v1351 = vlaneseq
  %v1352 = vshrl.u32 %v1351, 7
  %v1353 = vsub.s32 6, %v1352
  %v1354 = vrot.slane %v1321, %v1353
  %v1355 = vlaneseq
  %v1356 = vshrl.u32 %v1355, 7
  %v1357 = vsub.s32 7, %v1356
  %v1358 = vrot.slane %v1321, %v1357
  %v1359 = vlaneseq
  %v1360 = vshrl.u32 %v1359, 7
  %v1361 = vsub.s32 0, %v1360
  %v1362 = vrot.slane %v1324, %v1361
  %v1363 = vlaneseq
  %v1364 = vshrl.u32 %v1363, 7
  %v1365 = vsub.s32 1, %v1364
  %v1366 = vrot.slane %v1324, %v1365
  %v1367 = vlaneseq
  %v1368 = vshrl.u32 %v1367, 7
  %v1369 = vsub.s32 2, %v1368
  %v1370 = vrot.slane %v1324, %v1369
  %v1371 = vlaneseq
  %v1372 = vshrl.u32 %v1371, 7
  %v1373 = vsub.s32 3, %v1372
  %v1374 = vrot.slane %v1324, %v1373
  %v1375 = vlaneseq
  %v1376 = vshrl.u32 %v1375, 7
  %v1377 = vsub.s32 4, %v1376
  %v1378 = vrot.slane %v1324, %v1377
  %v1379 = vlaneseq
  %v1380 = vshrl.u32 %v1379, 7
  %v1381 = vsub.s32 5, %v1380
  %v1382 = vrot.slane %v1324, %v1381
  %v1383 = vlaneseq
  %v1384 = vshrl.u32 %v1383, 7
  %v1385 = vsub.s32 6, %v1384
  %v1386 = vrot.slane %v1324, %v1385
  %v1387 = vlaneseq
  %v1388 = vshrl.u32 %v1387, 7
  %v1389 = vsub.s32 7, %v1388
  %v1390 = vrot.slane %v1324, %v1389
  %v1407 = vrcp.pop %v1330
  %v1408 = vmul.f32 %v1144, %v1407
  %v1409 = vrcp.pop %v1334
  %v1410 = vmul.f32 %v1146, %v1409
  %v1411 = vrcp.pop %v1338
  %v1412 = vmul.f32 %v1148, %v1411
  %v1413 = vrcp.pop %v1342
  %v1414 = vmul.f32 %v1150, %v1413
  %v1415 = vrcp.pop %v1346
  %v1416 = vmul.f32 %v1152, %v1415
  %v1417 = vrcp.pop %v1350
  %v1418 = vmul.f32 %v1154, %v1417
  %v1419 = vrcp.pop %v1354
  %v1420 = vmul.f32 %v1156, %v1419
  %v1421 = vrcp.pop %v1358
  %v1422 = vmul.f32 %v1158, %v1421
  %v1423 = vrcp.pop %v1362
  %v1424 = vmul.f32 %v1160, %v1423
  %v1425 = vrcp.pop %v1366
  %v1426 = vmul.f32 %v1162, %v1425
  %v1427 = vrcp.pop %v1370
  %v1428 = vmul.f32 %v1164, %v1427
  %v1429 = vrcp.pop %v1374
  %v1430 = vmul.f32 %v1166, %v1429
  %v1431 = vrcp.pop %v1378
  %v1432 = vmul.f32 %v1168, %v1431
  %v1433 = vrcp.pop %v1382
  %v1434 = vmul.f32 %v1170, %v1433
  %v1435 = vrcp.pop %v1386
  %v1436 = vmul.f32 %v1172, %v1435
  %v1437 = vrcp.pop %v1390
  %v1438 = vmul.f32 %v1174, %v1437
  %1455 = vset.pattern.permute.xlu0 0
  %1456 = vperm.xlu0 %1455, %v840
  %v1457 = vpop.permute.xlu0 %1456
  %1458 = vset.pattern.permute.xlu0 0
  %1459 = vperm.xlu0 %1458, %v842
  %v1460 = vpop.permute.xlu0 %1459
  %1461 = vset.pattern.permute.xlu0 0
  %1462 = vperm.xlu0 %1461, %v844
  %v1463 = vpop.permute.xlu0 %1462
  %1464 = vset.pattern.permute.xlu0 0
  %1465 = vperm.xlu0 %1464, %v846
  %v1466 = vpop.permute.xlu0 %1465
  %1467 = vset.pattern.permute.xlu0 0
  %1468 = vperm.xlu0 %1467, %v848
  %v1469 = vpop.permute.xlu0 %1468
  %1470 = vset.pattern.permute.xlu0 0
  %1471 = vperm.xlu0 %1470, %v850
  %v1472 = vpop.permute.xlu0 %1471
  %1473 = vset.pattern.permute.xlu0 0
  %1474 = vperm.xlu0 %1473, %v852
  %v1475 = vpop.permute.xlu0 %1474
  %1476 = vset.pattern.permute.xlu0 0
  %1477 = vperm.xlu0 %1476, %v854
  %v1478 = vpop.permute.xlu0 %1477
  %1479 = vset.pattern.permute.xlu0 0
  %1480 = vperm.xlu0 %1479, %v856
  %v1481 = vpop.permute.xlu0 %1480
  %1482 = vset.pattern.permute.xlu0 0
  %1483 = vperm.xlu0 %1482, %v858
  %v1484 = vpop.permute.xlu0 %1483
  %1485 = vset.pattern.permute.xlu0 0
  %1486 = vperm.xlu0 %1485, %v860
  %v1487 = vpop.permute.xlu0 %1486
  %1488 = vset.pattern.permute.xlu0 0
  %1489 = vperm.xlu0 %1488, %v862
  %v1490 = vpop.permute.xlu0 %1489
  %1491 = vset.pattern.permute.xlu0 0
  %1492 = vperm.xlu0 %1491, %v864
  %v1493 = vpop.permute.xlu0 %1492
  %1494 = vset.pattern.permute.xlu0 0
  %1495 = vperm.xlu0 %1494, %v866
  %v1496 = vpop.permute.xlu0 %1495
  %1497 = vset.pattern.permute.xlu0 0
  %1498 = vperm.xlu0 %1497, %v868
  %v1499 = vpop.permute.xlu0 %1498
  %1500 = vset.pattern.permute.xlu0 0
  %1501 = vperm.xlu0 %1500, %v870
  %v1502 = vpop.permute.xlu0 %1501
  %v1503 = vlaneseq
  %v1504 = vshrl.u32 %v1503, 7
  %v1505 = vsub.s32 %v383, %v1504
  %v1506 = vrot.slane %v1457, %v1505
  %v1507 = vadd.s32 %v383, 4294967288
  %v1508 = vlaneseq
  %v1509 = vshrl.u32 %v1508, 7
  %v1510 = vsub.s32 %v1507, %v1509
  %v1511 = vrot.slane %v1460, %v1510
  %vm1512 = vcmask 130112
  %v1513 = vsel %vm1512, %v1511, %v1506
  %v1514 = vadd.s32 %v383, 4294967280
  %v1515 = vlaneseq
  %v1516 = vshrl.u32 %v1515, 7
  %v1517 = vsub.s32 %v1514, %v1516
  %v1518 = vrot.slane %v1463, %v1517
  %vm1519 = vcmask 195712
  %v1520 = vsel %vm1519, %v1518, %v1513
  %v1521 = vadd.s32 %v383, 4294967272
  %v1522 = vlaneseq
  %v1523 = vshrl.u32 %v1522, 7
  %v1524 = vsub.s32 %v1521, %v1523
  %v1525 = vrot.slane %v1466, %v1524
  %vm1526 = vcmask 261312
  %v1527 = vsel %vm1526, %v1525, %v1520
  %v1528 = vadd.s32 %v383, 4294967264
  %v1529 = vlaneseq
  %v1530 = vshrl.u32 %v1529, 7
  %v1531 = vsub.s32 %v1528, %v1530
  %v1532 = vrot.slane %v1469, %v1531
  %vm1533 = vcmask 326912
  %v1534 = vsel %vm1533, %v1532, %v1527
  %v1535 = vadd.s32 %v383, 4294967256
  %v1536 = vlaneseq
  %v1537 = vshrl.u32 %v1536, 7
  %v1538 = vsub.s32 %v1535, %v1537
  %v1539 = vrot.slane %v1472, %v1538
  %vm1540 = vcmask 392512
  %v1541 = vsel %vm1540, %v1539, %v1534
  %v1542 = vadd.s32 %v383, 4294967248
  %v1543 = vlaneseq
  %v1544 = vshrl.u32 %v1543, 7
  %v1545 = vsub.s32 %v1542, %v1544
  %v1546 = vrot.slane %v1475, %v1545
  %vm1547 = vcmask 458112
  %v1548 = vsel %vm1547, %v1546, %v1541
  %v1549 = vadd.s32 %v383, 4294967240
  %v1550 = vlaneseq
  %v1551 = vshrl.u32 %v1550, 7
  %v1552 = vsub.s32 %v1549, %v1551
  %v1553 = vrot.slane %v1478, %v1552
  %vm1554 = vcmask 523712
  %v1555 = vsel %vm1554, %v1553, %v1548
  %v1556 = vadd.s32 %v383, 4294967232
  %v1557 = vlaneseq
  %v1558 = vshrl.u32 %v1557, 7
  %v1559 = vsub.s32 %v1556, %v1558
  %v1560 = vrot.slane %v1481, %v1559
  %vm1561 = vcmask 589312
  %v1562 = vsel %vm1561, %v1560, %v1555
  %v1563 = vadd.s32 %v383, 4294967224
  %v1564 = vlaneseq
  %v1565 = vshrl.u32 %v1564, 7
  %v1566 = vsub.s32 %v1563, %v1565
  %v1567 = vrot.slane %v1484, %v1566
  %vm1568 = vcmask 654912
  %v1569 = vsel %vm1568, %v1567, %v1562
  %v1570 = vadd.s32 %v383, 4294967216
  %v1571 = vlaneseq
  %v1572 = vshrl.u32 %v1571, 7
  %v1573 = vsub.s32 %v1570, %v1572
  %v1574 = vrot.slane %v1487, %v1573
  %vm1575 = vcmask 720512
  %v1576 = vsel %vm1575, %v1574, %v1569
  %v1577 = vadd.s32 %v383, 4294967208
  %v1578 = vlaneseq
  %v1579 = vshrl.u32 %v1578, 7
  %v1580 = vsub.s32 %v1577, %v1579
  %v1581 = vrot.slane %v1490, %v1580
  %vm1582 = vcmask 786112
  %v1583 = vsel %vm1582, %v1581, %v1576
  %v1584 = vadd.s32 %v383, 4294967200
  %v1585 = vlaneseq
  %v1586 = vshrl.u32 %v1585, 7
  %v1587 = vsub.s32 %v1584, %v1586
  %v1588 = vrot.slane %v1493, %v1587
  %vm1589 = vcmask 851712
  %v1590 = vsel %vm1589, %v1588, %v1583
  %v1591 = vadd.s32 %v383, 4294967192
  %v1592 = vlaneseq
  %v1593 = vshrl.u32 %v1592, 7
  %v1594 = vsub.s32 %v1591, %v1593
  %v1595 = vrot.slane %v1496, %v1594
  %vm1596 = vcmask 917312
  %v1597 = vsel %vm1596, %v1595, %v1590
  %v1598 = vadd.s32 %v383, 4294967184
  %v1599 = vlaneseq
  %v1600 = vshrl.u32 %v1599, 7
  %v1601 = vsub.s32 %v1598, %v1600
  %v1602 = vrot.slane %v1499, %v1601
  %vm1603 = vcmask 982912
  %v1604 = vsel %vm1603, %v1602, %v1597
  %v1605 = vadd.s32 %v383, 4294967176
  %v1606 = vlaneseq
  %v1607 = vshrl.u32 %v1606, 7
  %v1608 = vsub.s32 %v1605, %v1607
  %v1609 = vrot.slane %v1502, %v1608
  %vm1610 = vcmask 1048512
  %v1611 = vsel %vm1610, %v1609, %v1604
  %1629 = vset.pattern.permute.xlu0 0
  %1630 = vperm.xlu0 %1629, %v1408
  %v1631 = vpop.permute.xlu0 %1630
  %1632 = vset.pattern.permute.xlu0 0
  %1633 = vperm.xlu0 %1632, %v1410
  %v1634 = vpop.permute.xlu0 %1633
  %1635 = vset.pattern.permute.xlu0 0
  %1636 = vperm.xlu0 %1635, %v1412
  %v1637 = vpop.permute.xlu0 %1636
  %1638 = vset.pattern.permute.xlu0 0
  %1639 = vperm.xlu0 %1638, %v1414
  %v1640 = vpop.permute.xlu0 %1639
  %1641 = vset.pattern.permute.xlu0 0
  %1642 = vperm.xlu0 %1641, %v1416
  %v1643 = vpop.permute.xlu0 %1642
  %1644 = vset.pattern.permute.xlu0 0
  %1645 = vperm.xlu0 %1644, %v1418
  %v1646 = vpop.permute.xlu0 %1645
  %1647 = vset.pattern.permute.xlu0 0
  %1648 = vperm.xlu0 %1647, %v1420
  %v1649 = vpop.permute.xlu0 %1648
  %1650 = vset.pattern.permute.xlu0 0
  %1651 = vperm.xlu0 %1650, %v1422
  %v1652 = vpop.permute.xlu0 %1651
  %1653 = vset.pattern.permute.xlu0 0
  %1654 = vperm.xlu0 %1653, %v1424
  %v1655 = vpop.permute.xlu0 %1654
  %1656 = vset.pattern.permute.xlu0 0
  %1657 = vperm.xlu0 %1656, %v1426
  %v1658 = vpop.permute.xlu0 %1657
  %1659 = vset.pattern.permute.xlu0 0
  %1660 = vperm.xlu0 %1659, %v1428
  %v1661 = vpop.permute.xlu0 %1660
  %1662 = vset.pattern.permute.xlu0 0
  %1663 = vperm.xlu0 %1662, %v1430
  %v1664 = vpop.permute.xlu0 %1663
  %1665 = vset.pattern.permute.xlu0 0
  %1666 = vperm.xlu0 %1665, %v1432
  %v1667 = vpop.permute.xlu0 %1666
  %1668 = vset.pattern.permute.xlu0 0
  %1669 = vperm.xlu0 %1668, %v1434
  %v1670 = vpop.permute.xlu0 %1669
  %1671 = vset.pattern.permute.xlu0 0
  %1672 = vperm.xlu0 %1671, %v1436
  %v1673 = vpop.permute.xlu0 %1672
  %1674 = vset.pattern.permute.xlu0 0
  %1675 = vperm.xlu0 %1674, %v1438
  %v1676 = vpop.permute.xlu0 %1675
  %v1677 = vlaneseq
  %v1678 = vshrl.u32 %v1677, 7
  %v1679 = vsub.s32 %v383, %v1678
  %v1680 = vrot.slane %v1631, %v1679
  %v1681 = vlaneseq
  %v1682 = vshrl.u32 %v1681, 7
  %v1683 = vsub.s32 %v1507, %v1682
  %v1684 = vrot.slane %v1634, %v1683
  %v1685 = vsel %vm1512, %v1684, %v1680
  %v1686 = vlaneseq
  %v1687 = vshrl.u32 %v1686, 7
  %v1688 = vsub.s32 %v1514, %v1687
  %v1689 = vrot.slane %v1637, %v1688
  %v1690 = vsel %vm1519, %v1689, %v1685
  %v1691 = vlaneseq
  %v1692 = vshrl.u32 %v1691, 7
  %v1693 = vsub.s32 %v1521, %v1692
  %v1694 = vrot.slane %v1640, %v1693
  %v1695 = vsel %vm1526, %v1694, %v1690
  %v1696 = vlaneseq
  %v1697 = vshrl.u32 %v1696, 7
  %v1698 = vsub.s32 %v1528, %v1697
  %v1699 = vrot.slane %v1643, %v1698
  %v1700 = vsel %vm1533, %v1699, %v1695
  %v1701 = vlaneseq
  %v1702 = vshrl.u32 %v1701, 7
  %v1703 = vsub.s32 %v1535, %v1702
  %v1704 = vrot.slane %v1646, %v1703
  %v1705 = vsel %vm1540, %v1704, %v1700
  %v1706 = vlaneseq
  %v1707 = vshrl.u32 %v1706, 7
  %v1708 = vsub.s32 %v1542, %v1707
  %v1709 = vrot.slane %v1649, %v1708
  %v1710 = vsel %vm1547, %v1709, %v1705
  %v1711 = vlaneseq
  %v1712 = vshrl.u32 %v1711, 7
  %v1713 = vsub.s32 %v1549, %v1712
  %v1714 = vrot.slane %v1652, %v1713
  %v1715 = vsel %vm1554, %v1714, %v1710
  %v1716 = vlaneseq
  %v1717 = vshrl.u32 %v1716, 7
  %v1718 = vsub.s32 %v1556, %v1717
  %v1719 = vrot.slane %v1655, %v1718
  %v1720 = vsel %vm1561, %v1719, %v1715
  %v1721 = vlaneseq
  %v1722 = vshrl.u32 %v1721, 7
  %v1723 = vsub.s32 %v1563, %v1722
  %v1724 = vrot.slane %v1658, %v1723
  %v1725 = vsel %vm1568, %v1724, %v1720
  %v1726 = vlaneseq
  %v1727 = vshrl.u32 %v1726, 7
  %v1728 = vsub.s32 %v1570, %v1727
  %v1729 = vrot.slane %v1661, %v1728
  %v1730 = vsel %vm1575, %v1729, %v1725
  %v1731 = vlaneseq
  %v1732 = vshrl.u32 %v1731, 7
  %v1733 = vsub.s32 %v1577, %v1732
  %v1734 = vrot.slane %v1664, %v1733
  %v1735 = vsel %vm1582, %v1734, %v1730
  %v1736 = vlaneseq
  %v1737 = vshrl.u32 %v1736, 7
  %v1738 = vsub.s32 %v1584, %v1737
  %v1739 = vrot.slane %v1667, %v1738
  %v1740 = vsel %vm1589, %v1739, %v1735
  %v1741 = vlaneseq
  %v1742 = vshrl.u32 %v1741, 7
  %v1743 = vsub.s32 %v1591, %v1742
  %v1744 = vrot.slane %v1670, %v1743
  %v1745 = vsel %vm1596, %v1744, %v1740
  %v1746 = vlaneseq
  %v1747 = vshrl.u32 %v1746, 7
  %v1748 = vsub.s32 %v1598, %v1747
  %v1749 = vrot.slane %v1673, %v1748
  %v1750 = vsel %vm1603, %v1749, %v1745
  %v1751 = vlaneseq
  %v1752 = vshrl.u32 %v1751, 7
  %v1753 = vsub.s32 %v1605, %v1752
  %v1754 = vrot.slane %v1676, %v1753
  %v1755 = vsel %vm1610, %v1754, %v1750
  %vm1757 = vcmask 1040384
  %v1758 = vsel %vm1757, %v1611, %v1755
  %1759 = vst [vmem:[%s5] sm:$0x3] %v1758
  // Predicated region
  $region22: #{graph_conv_forward.2} parent=0 // pred_check
    _
  $region23: #{graph_conv_forward.2} parent=0 // pred_check_branch
    %1761 = sbr.rel (0) target = $region25
  $region24: #{graph_conv_forward.2} parent=0 // pred_region
    _
  $region25: #{graph_conv_forward.2} parent=0 // pred_fallthru
    _
  // Predicated region
  $region26: #{graph_conv_forward.2} parent=0 // pred_check
    _
  $region27: #{graph_conv_forward.2} parent=0 // pred_check_branch
    %1763 = sbr.rel (0) target = $region29
  $region28: #{graph_conv_forward.2} parent=0 // pred_region
    _
  $region29: #{graph_conv_forward.2} parent=0 // pred_fallthru
    _

</llo_original>
